<compile_context>
chip_gen: v5e
topology: v5e:2x2
jax: 0.10.0
libtpu: 0.0.40
codegen_flags: <defaults>
</compile_context>

<pallas_src>
import functools

import jax
import jax.numpy as jnp
import numpy as np
from jax.experimental import pallas as pl
from jax.experimental.pallas import tpu as pltpu

_PACK = 16            # batch elements packed per row (16*out_dim=128 -> dense stores)
_ROW_ALIGN = 8        # sublane granule for the packed-row tile dimension
_MIN_ROWS_FOR_SPLIT = 64   # >= this many rows (1024 batch) -> force >=2 steps on v7x


def _tpu_generation() -> int:
    """Best-effort TPU generation; unknown -> 7 (most conservative VMEM budget)."""
    try:
        kind = jax.devices()[0].device_kind.lower()
    except Exception:
        return 7
    for g in (7, 6, 5, 4, 3):
        if f"v{g}" in kind:
            return g
    return 7


def _block_diag(w_t, pack):
    """[in, out] -> block-diagonal [pack*in, pack*out] with `pack` copies of w_t."""
    return jnp.kron(jnp.eye(pack, dtype=jnp.float32), w_t.astype(jnp.float32))


def prepare_params(params, *, matmul_dtype=jnp.bfloat16, pack=_PACK):
    """One-time, host-side parameter prep (hoisted out of the per-call path).

    params: ((w0, b0), ..., (wL, bL)) with w in PyTorch [out, in] layout, b [out].
    Each weight becomes a block-diagonal [pack*in, pack*out] operand so the kernel can
    keep `pack` batch elements per VMEM row (lane-dense activations, natural HBM
    layout, zero transposes).  Biases are tiled to [1, pack*out] f32 rows.
    """
    prepped = []
    for w, b in params:
        w = jnp.asarray(w)
        b = jnp.asarray(b)
        we = _block_diag(w.T, pack).astype(matmul_dtype)
        be = jnp.tile(b.astype(jnp.float32), pack).reshape(1, -1)
        prepped.append((we, be))
    return tuple(prepped)


def _make_kernel(n_layers, matmul_dtype, approx_sigmoid):
    def silu(v):  # v: f32, fully lane-dense
        if approx_sigmoid:
            # exp stays on the EUP; the divide becomes a cheap approx vrcp (v6e/v7x).
            return v * pl.reciprocal(1.0 + jnp.exp(-v), approx=True)
        return v * jax.nn.sigmoid(v)   # v5e: keep plain f32 elementwise path

    def kernel(x_ref, *refs):
        o_ref = refs[-1]
        wb = refs[:-1]                 # (w0, b0, w1, b1, ..., wL, bL), resident in VMEM

        x = x_ref[...].astype(matmul_dtype)                     # [rows, pack*in]

        # input_proj + silu -> packed [rows, pack*hidden]
        h = jnp.dot(x, wb[0][...], preferred_element_type=jnp.float32) + wb[1][...]
        h = silu(h)

        # residual MLPBlock(s): h = h + silu(h @ Wi^T + bi)
        for i in range(1, n_layers - 1):
            y = jnp.dot(h.astype(matmul_dtype), wb[2 * i][...],
                        preferred_element_type=jnp.float32) + wb[2 * i + 1][...]
            h = h + silu(y)

        # output_proj -> packed [rows, pack*out]; lane-dense, natural-layout store
        out = jnp.dot(h.astype(matmul_dtype), wb[2 * (n_layers - 1)][...],
                      preferred_element_type=jnp.float32) + wb[2 * n_layers - 1][...]
        o_ref[...] = out.astype(o_ref.dtype)

    return kernel


def _choose_tile_rows(n_rows, cap_rows, two_steps):
    """Rows (of _PACK batch elements) per grid step.

    Multiple of _ROW_ALIGN unless it is the full array; on v7x prefer >=2 grid steps
    (two TensorCores) once the problem is big enough.
    """
    if n_rows <= cap_rows and not (two_steps and n_rows >= _MIN_ROWS_FOR_SPLIT):
        return n_rows
    target = min(cap_rows, n_rows)
    if two_steps:
        target = min(target, pl.cdiv(n_rows, 2))
    target = max(_ROW_ALIGN, (target // _ROW_ALIGN) * _ROW_ALIGN)
    return min(target, n_rows)


def residual_mlp(x, prepped_params, *, block_batch=None, out_dtype=None,
                 interpret=False):
    """ResidualMLP forward.

    x: [B, in_dim] float32 (natural layout — no host-side transposes or casts).
    prepped_params: output of prepare_params(...).
    Returns [B, out_dim] in out_dtype (default x.dtype; pass jnp.bfloat16 to cut
    store traffic further — precision is already bf16-MXU-limited).
    """
    B, in_dim = x.shape
    n_layers = len(prepped_params)
    pack = _PACK
    out_dtype = x.dtype if out_dtype is None else out_dtype

    packed_in = prepped_params[0][0].shape[0]
    assert packed_in == pack * in_dim, "params were prepared for a different in_dim"
    packed_out = prepped_params[-1][0].shape[1]
    out_dim = packed_out // pack
    matmul_dtype = prepped_params[0][0].dtype

    gen = _tpu_generation()
    if block_batch is None:
        # 16K-64K batch / grid step amortizes the ~0.35us/step pipeline overhead;
        # cap lower on v7x (64 MiB physical VMEM) than on v5e/v6e (128 MiB).
        block_batch = 32768 if gen >= 7 else 65536
    # Raise the scoped-VMEM limit (v5e default is only 16 MiB) but stay well under
    # physical capacity (v7x: 64 MiB, v5e/v6e: 128 MiB).
    vmem_limit = (48 if gen >= 7 else 100) * 1024 * 1024
    approx_sigmoid = gen >= 6   # v5e: keep plain f32 sigmoid

    # Pack `pack` batch elements per row: [B, in] -> [B/pack, pack*in].  Row-major
    # reshape = free bitcast; this replaces the old HBM-level x.T / y.T passes.
    b_pad = pl.cdiv(B, pack) * pack
    xp = x if b_pad == B else jnp.pad(x, ((0, b_pad - B), (0, 0)))
    xr = xp.reshape(b_pad // pack, pack * in_dim)
    n_rows = b_pad // pack

    tile_rows = _choose_tile_rows(n_rows, max(_ROW_ALIGN, block_batch // pack),
                                  two_steps=(gen >= 7))
    grid = (pl.cdiv(n_rows, tile_rows),)

    def resident(shape):
        # Full-array block + constant index_map: DMA'd once, stays resident in VMEM.
        return pl.BlockSpec(shape, lambda i: (0,) * len(shape))

    in_specs = [pl.BlockSpec((tile_rows, packed_in), lambda i: (i, 0))]
    flat_params = []
    for we, be in prepped_params:
        in_specs.append(resident(we.shape))
        in_specs.append(resident(be.shape))
        flat_params += [we, be]

    out_packed = pl.pallas_call(
        _make_kernel(n_layers, matmul_dtype, approx_sigmoid),
        out_shape=jax.ShapeDtypeStruct((n_rows, packed_out), out_dtype),
        grid=grid,
        in_specs=in_specs,
        out_specs=pl.BlockSpec((tile_rows, packed_out), lambda i: (i, 0)),
        compiler_params=pltpu.CompilerParams(
            dimension_semantics=("parallel",),
            vmem_limit_bytes=vmem_limit),
        interpret=interpret,
    )(xr, *flat_params)

    # Free bitcast back to the natural [B, out_dim] layout (drop any pad rows).
    return out_packed.reshape(b_pad, out_dim)[:B]


def init_linear(key, in_dim, out_dim):
    """Deterministic init mimicking torch.nn.Linear (uniform +/- 1/sqrt(in_dim))."""
    kw, kb = jax.random.split(key)
    bound = 1.0 / np.sqrt(in_dim)
    w = jax.random.uniform(kw, (out_dim, in_dim), jnp.float32, -bound, bound)
    b = jax.random.uniform(kb, (out_dim,), jnp.float32, -bound, bound)
    return w, b


def reference_forward(x, params):
    """Pure-f32 JAX reference matching the PyTorch module semantics."""
    (w0, b0), *blocks, (wo, bo) = params
    h = x @ w0.T + b0
    h = h * jax.nn.sigmoid(h)
    for w, b in blocks:
        y = h @ w.T + b
        h = h + y * jax.nn.sigmoid(y)
    return h @ wo.T + bo


if __name__ == "__main__":
    key = jax.random.PRNGKey(0)

    #            (batch, in_dim, hidden_dims,  out_dim, block_batch)
    configs = [
        (4104, 16, [32, 32], 8, 1024),      # multi-step grid + partial last tile
        (2002, 16, [32, 32], 8, None),      # B not a multiple of the pack -> pad path
        (1024, 16, [32, 32, 32], 8, None),  # two residual blocks
    ]

    for (B, in_dim, hidden, out_dim, bb) in configs:
        dims = [in_dim] + hidden + [out_dim]
        n_lin = len(dims) - 1
        keys = jax.random.split(key, n_lin + 2)
        key, kx, layer_keys = keys[0], keys[1], keys[2:]

        x = jax.random.normal(kx, (B, in_dim), jnp.float32)
        params = tuple(init_linear(layer_keys[i], dims[i], dims[i + 1])
                       for i in range(n_lin))

        prepped = prepare_params(params)                  # one-time host-side prep
        fwd = jax.jit(functools.partial(residual_mlp, block_batch=bb))
        out = jax.block_until_ready(fwd(x, prepped))

        ref = reference_forward(x, params)
        # bf16 MXU operands vs. f32 reference -> loosened tolerance.
        np.testing.assert_allclose(np.asarray(out), np.asarray(ref),
                                   rtol=3e-2, atol=3e-2)

    print("KERNEL_OK")
</pallas_src>

<mosaic_0001>
module attributes {stable_mosaic.version = 11 : i64} {
  func.func @kernel(%arg0: i32, %arg1: memref<64x256xf32, #tpu.memory_space<vmem>>, %arg2: memref<256x512xbf16, #tpu.memory_space<vmem>>, %arg3: memref<1x512xf32, #tpu.memory_space<vmem>>, %arg4: memref<512x512xbf16, #tpu.memory_space<vmem>>, %arg5: memref<1x512xf32, #tpu.memory_space<vmem>>, %arg6: memref<512x128xbf16, #tpu.memory_space<vmem>>, %arg7: memref<1x128xf32, #tpu.memory_space<vmem>>, %arg8: memref<64x128xf32, #tpu.memory_space<vmem>>) attributes {dimension_semantics = [#tpu.dimension_semantics<parallel>], iteration_bounds = array<i64: 5>, scalar_prefetch = 0 : i64, scratch_operands = 0 : i64, tpu.core_type = #tpu.core_type<tc>, window_params = [{transform_indices = @transform_0, window_bounds = array<i64: 64, 256>}, {pipeline_mode = #tpu.pipeline_mode<synchronous>, transform_indices = @transform_1, window_bounds = array<i64: 256, 512>}, {pipeline_mode = #tpu.pipeline_mode<synchronous>, transform_indices = @transform_2, window_bounds = array<i64: 1, 512>}, {pipeline_mode = #tpu.pipeline_mode<synchronous>, transform_indices = @transform_3, window_bounds = array<i64: 512, 512>}, {pipeline_mode = #tpu.pipeline_mode<synchronous>, transform_indices = @transform_4, window_bounds = array<i64: 1, 512>}, {pipeline_mode = #tpu.pipeline_mode<synchronous>, transform_indices = @transform_5, window_bounds = array<i64: 512, 128>}, {pipeline_mode = #tpu.pipeline_mode<synchronous>, transform_indices = @transform_6, window_bounds = array<i64: 1, 128>}, {transform_indices = @transform_7, window_bounds = array<i64: 64, 128>}]} {
    %c0 = arith.constant 0 : index
    %c0_0 = arith.constant 0 : index
    %0 = vector.load %arg1[%c0, %c0_0] : memref<64x256xf32, #tpu.memory_space<vmem>>, vector<64x256xf32>
    %1 = arith.truncf %0 : vector<64x256xf32> to vector<64x256xbf16>
    %c0_1 = arith.constant 0 : index
    %c0_2 = arith.constant 0 : index
    %2 = vector.load %arg2[%c0_1, %c0_2] : memref<256x512xbf16, #tpu.memory_space<vmem>>, vector<256x512xbf16>
    %cst = arith.constant dense<0.000000e+00> : vector<64x512xf32>
    %3 = tpu.matmul %1, %2, %cst {dimension_numbers = #tpu.dot_dimension_numbers<[1], [0], [0], [1], [0, 0, 1, 1], [], []>} : vector<64x256xbf16>, vector<256x512xbf16>, vector<64x512xf32> -> vector<64x512xf32>
    %c0_3 = arith.constant 0 : index
    %c0_4 = arith.constant 0 : index
    %4 = vector.load %arg3[%c0_3, %c0_4] : memref<1x512xf32, #tpu.memory_space<vmem>>, vector<1x512xf32>
    %5 = vector.broadcast %4 : vector<1x512xf32> to vector<64x512xf32>
    %6 = arith.addf %3, %5 : vector<64x512xf32>
    %cst_5 = arith.constant 0.000000e+00 : f32
    %7 = vector.broadcast %cst_5 : f32 to vector<64x512xf32>
    %8 = arith.subf %7, %6 : vector<64x512xf32>
    %9 = math.exp %8 : vector<64x512xf32>
    %cst_6 = arith.constant 1.000000e+00 : f32
    %10 = vector.broadcast %cst_6 : f32 to vector<64x512xf32>
    %11 = arith.addf %10, %9 : vector<64x512xf32>
    %12 = tpu.reciprocal %11 {approx = true} : vector<64x512xf32> -> vector<64x512xf32>
    %13 = arith.mulf %6, %12 : vector<64x512xf32>
    %14 = arith.truncf %13 : vector<64x512xf32> to vector<64x512xbf16>
    %c0_7 = arith.constant 0 : index
    %c0_8 = arith.constant 0 : index
    %15 = vector.load %arg4[%c0_7, %c0_8] : memref<512x512xbf16, #tpu.memory_space<vmem>>, vector<512x512xbf16>
    %cst_9 = arith.constant dense<0.000000e+00> : vector<64x512xf32>
    %16 = tpu.matmul %14, %15, %cst_9 {dimension_numbers = #tpu.dot_dimension_numbers<[1], [0], [0], [1], [0, 0, 1, 1], [], []>} : vector<64x512xbf16>, vector<512x512xbf16>, vector<64x512xf32> -> vector<64x512xf32>
    %c0_10 = arith.constant 0 : index
    %c0_11 = arith.constant 0 : index
    %17 = vector.load %arg5[%c0_10, %c0_11] : memref<1x512xf32, #tpu.memory_space<vmem>>, vector<1x512xf32>
    %18 = vector.broadcast %17 : vector<1x512xf32> to vector<64x512xf32>
    %19 = arith.addf %16, %18 : vector<64x512xf32>
    %cst_12 = arith.constant 0.000000e+00 : f32
    %20 = vector.broadcast %cst_12 : f32 to vector<64x512xf32>
    %21 = arith.subf %20, %19 : vector<64x512xf32>
    %22 = math.exp %21 : vector<64x512xf32>
    %cst_13 = arith.constant 1.000000e+00 : f32
    %23 = vector.broadcast %cst_13 : f32 to vector<64x512xf32>
    %24 = arith.addf %23, %22 : vector<64x512xf32>
    %25 = tpu.reciprocal %24 {approx = true} : vector<64x512xf32> -> vector<64x512xf32>
    %26 = arith.mulf %19, %25 : vector<64x512xf32>
    %27 = arith.addf %13, %26 : vector<64x512xf32>
    %28 = arith.truncf %27 : vector<64x512xf32> to vector<64x512xbf16>
    %c0_14 = arith.constant 0 : index
    %c0_15 = arith.constant 0 : index
    %29 = vector.load %arg6[%c0_14, %c0_15] : memref<512x128xbf16, #tpu.memory_space<vmem>>, vector<512x128xbf16>
    %cst_16 = arith.constant dense<0.000000e+00> : vector<64x128xf32>
    %30 = tpu.matmul %28, %29, %cst_16 {dimension_numbers = #tpu.dot_dimension_numbers<[1], [0], [0], [1], [0, 0, 1, 1], [], []>} : vector<64x512xbf16>, vector<512x128xbf16>, vector<64x128xf32> -> vector<64x128xf32>
    %c0_17 = arith.constant 0 : index
    %c0_18 = arith.constant 0 : index
    %31 = vector.load %arg7[%c0_17, %c0_18] : memref<1x128xf32, #tpu.memory_space<vmem>>, vector<1x128xf32>
    %32 = vector.broadcast %31 : vector<1x128xf32> to vector<64x128xf32>
    %33 = arith.addf %30, %32 : vector<64x128xf32>
    %c0_19 = arith.constant 0 : index
    %c0_20 = arith.constant 0 : index
    %34 = vector.load %arg8[%c0_19, %c0_20] : memref<64x128xf32, #tpu.memory_space<vmem>>, vector<64x128xf32>
    tpu.vector_store %arg8[%c0_19, %c0_20], %33 {strides = array<i32>} : memref<64x128xf32, #tpu.memory_space<vmem>>, vector<64x128xf32>,
    return
  }
  func.func @transform_0(%arg0: i32) -> (i32, i32) {
    %c0_i32 = arith.constant 0 : i32
    %c0_i32_0 = arith.constant 0 : i32
    return %arg0, %c0_i32 : i32, i32
  }
  func.func @transform_1(%arg0: i32) -> (i32, i32) {
    %c0_i32 = arith.constant 0 : i32
    %c0_i32_0 = arith.constant 0 : i32
    %c0_i32_1 = arith.constant 0 : i32
    return %c0_i32, %c0_i32_0 : i32, i32
  }
  func.func @transform_2(%arg0: i32) -> (i32, i32) {
    %c0_i32 = arith.constant 0 : i32
    %c0_i32_0 = arith.constant 0 : i32
    %c0_i32_1 = arith.constant 0 : i32
    return %c0_i32, %c0_i32_0 : i32, i32
  }
  func.func @transform_3(%arg0: i32) -> (i32, i32) {
    %c0_i32 = arith.constant 0 : i32
    %c0_i32_0 = arith.constant 0 : i32
    %c0_i32_1 = arith.constant 0 : i32
    return %c0_i32, %c0_i32_0 : i32, i32
  }
  func.func @transform_4(%arg0: i32) -> (i32, i32) {
    %c0_i32 = arith.constant 0 : i32
    %c0_i32_0 = arith.constant 0 : i32
    %c0_i32_1 = arith.constant 0 : i32
    return %c0_i32, %c0_i32_0 : i32, i32
  }
  func.func @transform_5(%arg0: i32) -> (i32, i32) {
    %c0_i32 = arith.constant 0 : i32
    %c0_i32_0 = arith.constant 0 : i32
    %c0_i32_1 = arith.constant 0 : i32
    return %c0_i32, %c0_i32_0 : i32, i32
  }
  func.func @transform_6(%arg0: i32) -> (i32, i32) {
    %c0_i32 = arith.constant 0 : i32
    %c0_i32_0 = arith.constant 0 : i32
    %c0_i32_1 = arith.constant 0 : i32
    return %c0_i32, %c0_i32_0 : i32, i32
  }
  func.func @transform_7(%arg0: i32) -> (i32, i32) {
    %c0_i32 = arith.constant 0 : i32
    %c0_i32_0 = arith.constant 0 : i32
    return %arg0, %c0_i32 : i32, i32
  }
}

</mosaic_0001>

<llo_original>
// kernel: residual_mlp.1
$region0: #{residual_mlp.1}
  #allocation0 [shape = 'u32[]', space=smem, size = 0x4, offset = 0x4, fixed_abs, tag = 'smem constant byte address 0x4 - core index']
  #allocation1 [shape = 'u32[72,128]{1,0:T(1,128)}', space=vmem, size = 0x9000, scoped, tag = 'internal scratch']
  %s0 = inlined_call_operand.vmem [shape: f32[257,256], index: 0, kind: input, shape index: {}]
  %s1 = inlined_call_operand.vmem [shape: bf16[256,512], index: 1, kind: input, shape index: {}]
  %s2 = inlined_call_operand.vmem [shape: f32[1,512], index: 2, kind: input, shape index: {}]
  %s3 = inlined_call_operand.vmem [shape: bf16[512,512], index: 3, kind: input, shape index: {}]
  %s4 = inlined_call_operand.vmem [shape: f32[1,512], index: 4, kind: input, shape index: {}]
  %s5 = inlined_call_operand.vmem [shape: bf16[512,128], index: 5, kind: input, shape index: {}]
  %s6 = inlined_call_operand.vmem [shape: f32[1,128], index: 6, kind: input, shape index: {}]
  %s7 = inlined_call_operand.vmem [shape: f32[257,128], index: 7, kind: output, shape index: {}]
  %s8 = sld [smem:[#allocation0]]
  $region109: #{residual_mlp.1} parent=0
    _
  %s10 = ssub.s32 1, %s8
  %s11 = scalar_select 0, %s10, %s8
  $region1: #{residual_mlp.1} parent=0
    #allocation2 [shape = 'u8[65536]{0}', space=vmem, size = 0x10000, scoped, tag = 'output window, operand 0']
    loop: start=0, step=1, limit=7
    $region2: #{residual_mlp.1} parent=1 // loop_pre_header
      _
    $region3: #{residual_mlp.1} parent=1 // loop_header
      %s13 = sphi 0, %s17
      %p14 = scmp.ge.s32.totalorder %s13, 7
      %s23 = sphi 0, %s25
      %s26 = sphi 0, %s23
      %s27 = sphi 0, %s26
      %s43 = sphi 0, %s27
      %s47 = sphi 0, %s47
      %s49 = sphi 0, %s47
      %s50 = sphi 0, %s49
      %s64 = sphi 0, %s50
      %s68 = sphi 0, %s68
      %s70 = sphi 0, %s68
      %s71 = sphi 0, %s70
      %s85 = sphi 0, %s71
      %s89 = sphi 0, %s89
      %s91 = sphi 0, %s89
      %s92 = sphi 0, %s91
      %s106 = sphi 0, %s92
      %s110 = sphi 0, %s110
      %s112 = sphi 0, %s110
      %s113 = sphi 0, %s112
      %s127 = sphi 0, %s113
      %s131 = sphi 0, %s131
      %s133 = sphi 0, %s131
      %s134 = sphi 0, %s133
      %s148 = sphi 0, %s134
      %s152 = sphi 0, %s152
      %s154 = sphi 0, %s152
      %s155 = sphi 0, %s154
      %s169 = sphi 0, %s155
      %s175 = sphi 0, %s177
      %s178 = sphi 0, %s175
      %s179 = sphi 0, %s178
      %s195 = sphi 0, %s179
    $region4: #{residual_mlp.1} parent=1 // loop_header_branch
      %16 = sbr.rel (%p14) target = $region8
    $region5: #{residual_mlp.1} parent=1 // loop_body
      %s18 = ssub.s32 %s13, 1
      %s19 = ssub.s32 %s13, 2
      %s20 = sadd.s32 %s13, 1
      %s21 = ssub.s32 %s13, %s20
      %p22 = scmp.eq.s32.totalorder %s21, 0
      %s24 = sadd.s32 %s23, 1
      %s25 = scalar_select %p22, %s23, %s24
      %p28 = pneg %p22
      %p29 = scmp.eq.s32.totalorder %s13, 4
      %p30 = por %p28, %p29
      %p31 = scmp.ne.s32.totalorder %s23, %s26
      %p32 = scmp.eq.s32.totalorder %s13, 0
      %p33 = por %p31, %p32
      %p34 = scmp.ne.s32.totalorder %s23, %s26
      %p35 = scmp.eq.s32.totalorder %s18, 4
      %p36 = por %p34, %p35
      %p37 = scmp.ne.s32.totalorder %s26, %s27
      %p38 = scmp.eq.s32.totalorder %s18, 0
      %p39 = por %p37, %p38
      %p40 = scmp.ne.s32.totalorder %s26, %s27
      %p41 = scmp.eq.s32.totalorder %s19, 4
      %p42 = por %p40, %p41
      %p44 = scmp.ne.s32.totalorder %s27, %s43
      %p45 = scmp.eq.s32.totalorder %s19, 0
      %p46 = por %p44, %p45
      %s48 = sadd.s32 %s47, 1
      %p51 = scmp.eq.s32.totalorder %s13, 4
      %p52 = scmp.ne.s32.totalorder %s47, %s49
      %p53 = scmp.eq.s32.totalorder %s13, 0
      %p54 = por %p52, %p53
      %p55 = scmp.ne.s32.totalorder %s47, %s49
      %p56 = scmp.eq.s32.totalorder %s18, 4
      %p57 = por %p55, %p56
      %p58 = scmp.ne.s32.totalorder %s49, %s50
      %p59 = scmp.eq.s32.totalorder %s18, 0
      %p60 = por %p58, %p59
      %p61 = scmp.ne.s32.totalorder %s49, %s50
      %p62 = scmp.eq.s32.totalorder %s19, 4
      %p63 = por %p61, %p62
      %p65 = scmp.ne.s32.totalorder %s50, %s64
      %p66 = scmp.eq.s32.totalorder %s19, 0
      %p67 = por %p65, %p66
      %s69 = sadd.s32 %s68, 1
      %p72 = scmp.eq.s32.totalorder %s13, 4
      %p73 = scmp.ne.s32.totalorder %s68, %s70
      %p74 = scmp.eq.s32.totalorder %s13, 0
      %p75 = por %p73, %p74
      %p76 = scmp.ne.s32.totalorder %s68, %s70
      %p77 = scmp.eq.s32.totalorder %s18, 4
      %p78 = por %p76, %p77
      %p79 = scmp.ne.s32.totalorder %s70, %s71
      %p80 = scmp.eq.s32.totalorder %s18, 0
      %p81 = por %p79, %p80
      %p82 = scmp.ne.s32.totalorder %s70, %s71
      %p83 = scmp.eq.s32.totalorder %s19, 4
      %p84 = por %p82, %p83
      %p86 = scmp.ne.s32.totalorder %s71, %s85
      %p87 = scmp.eq.s32.totalorder %s19, 0
      %p88 = por %p86, %p87
      %s90 = sadd.s32 %s89, 1
      %p93 = scmp.eq.s32.totalorder %s13, 4
      %p94 = scmp.ne.s32.totalorder %s89, %s91
      %p95 = scmp.eq.s32.totalorder %s13, 0
      %p96 = por %p94, %p95
      %p97 = scmp.ne.s32.totalorder %s89, %s91
      %p98 = scmp.eq.s32.totalorder %s18, 4
      %p99 = por %p97, %p98
      %p100 = scmp.ne.s32.totalorder %s91, %s92
      %p101 = scmp.eq.s32.totalorder %s18, 0
      %p102 = por %p100, %p101
      %p103 = scmp.ne.s32.totalorder %s91, %s92
      %p104 = scmp.eq.s32.totalorder %s19, 4
      %p105 = por %p103, %p104
      %p107 = scmp.ne.s32.totalorder %s92, %s106
      %p108 = scmp.eq.s32.totalorder %s19, 0
      %p109 = por %p107, %p108
      %s111 = sadd.s32 %s110, 1
      %p114 = scmp.eq.s32.totalorder %s13, 4
      %p115 = scmp.ne.s32.totalorder %s110, %s112
      %p116 = scmp.eq.s32.totalorder %s13, 0
      %p117 = por %p115, %p116
      %p118 = scmp.ne.s32.totalorder %s110, %s112
      %p119 = scmp.eq.s32.totalorder %s18, 4
      %p120 = por %p118, %p119
      %p121 = scmp.ne.s32.totalorder %s112, %s113
      %p122 = scmp.eq.s32.totalorder %s18, 0
      %p123 = por %p121, %p122
      %p124 = scmp.ne.s32.totalorder %s112, %s113
      %p125 = scmp.eq.s32.totalorder %s19, 4
      %p126 = por %p124, %p125
      %p128 = scmp.ne.s32.totalorder %s113, %s127
      %p129 = scmp.eq.s32.totalorder %s19, 0
      %p130 = por %p128, %p129
      %s132 = sadd.s32 %s131, 1
      %p135 = scmp.eq.s32.totalorder %s13, 4
      %p136 = scmp.ne.s32.totalorder %s131, %s133
      %p137 = scmp.eq.s32.totalorder %s13, 0
      %p138 = por %p136, %p137
      %p139 = scmp.ne.s32.totalorder %s131, %s133
      %p140 = scmp.eq.s32.totalorder %s18, 4
      %p141 = por %p139, %p140
      %p142 = scmp.ne.s32.totalorder %s133, %s134
      %p143 = scmp.eq.s32.totalorder %s18, 0
      %p144 = por %p142, %p143
      %p145 = scmp.ne.s32.totalorder %s133, %s134
      %p146 = scmp.eq.s32.totalorder %s19, 4
      %p147 = por %p145, %p146
      %p149 = scmp.ne.s32.totalorder %s134, %s148
      %p150 = scmp.eq.s32.totalorder %s19, 0
      %p151 = por %p149, %p150
      %s153 = sadd.s32 %s152, 1
      %p156 = scmp.eq.s32.totalorder %s13, 4
      %p157 = scmp.ne.s32.totalorder %s152, %s154
      %p158 = scmp.eq.s32.totalorder %s13, 0
      %p159 = por %p157, %p158
      %p160 = scmp.ne.s32.totalorder %s152, %s154
      %p161 = scmp.eq.s32.totalorder %s18, 4
      %p162 = por %p160, %p161
      %p163 = scmp.ne.s32.totalorder %s154, %s155
      %p164 = scmp.eq.s32.totalorder %s18, 0
      %p165 = por %p163, %p164
      %p166 = scmp.ne.s32.totalorder %s154, %s155
      %p167 = scmp.eq.s32.totalorder %s19, 4
      %p168 = por %p166, %p167
      %p170 = scmp.ne.s32.totalorder %s155, %s169
      %p171 = scmp.eq.s32.totalorder %s19, 0
      %p172 = por %p170, %p171
      %s173 = ssub.s32 %s13, %s20
      %p174 = scmp.eq.s32.totalorder %s173, 0
      %s176 = sadd.s32 %s175, 1
      %s177 = scalar_select %p174, %s175, %s176
      %p180 = pneg %p174
      %p181 = scmp.eq.s32.totalorder %s13, 4
      %p182 = por %p180, %p181
      %p183 = scmp.ne.s32.totalorder %s175, %s178
      %p184 = scmp.eq.s32.totalorder %s13, 0
      %p185 = por %p183, %p184
      %p186 = scmp.ne.s32.totalorder %s175, %s178
      %p187 = scmp.eq.s32.totalorder %s18, 4
      %p188 = por %p186, %p187
      %p189 = scmp.ne.s32.totalorder %s178, %s179
      %p190 = scmp.eq.s32.totalorder %s18, 0
      %p191 = por %p189, %p190
      %p192 = scmp.ne.s32.totalorder %s178, %s179
      %p193 = scmp.eq.s32.totalorder %s19, 4
      %p194 = por %p192, %p193
      %p196 = scmp.ne.s32.totalorder %s179, %s195
      %p197 = scmp.eq.s32.totalorder %s19, 0
      %p198 = por %p196, %p197
      %p199 = scmp.le.s32.totalorder 1, %s13
      %p200 = scmp.lt.s32.totalorder %s13, 6
      %p201 = pnand %p199, %p200
      %p202 = pneg %p201
      // Predicated region
      $region9: #{residual_mlp.1} parent=5 // pred_check
        _
      $region10: #{residual_mlp.1} parent=5 // pred_check_branch
        %204 = sbr.rel (%p201) target = $region12
      $region11: #{residual_mlp.1} parent=5 // pred_region
        %s205 = ssub.s32 %s13, 1
        // Predicated region
        $region13: #{residual_mlp.1} parent=11 // pred_check
          %p206 = pneg %p60
        $region14: #{residual_mlp.1} parent=11 // pred_check_branch
          %208 = sbr.rel (%p206) target = $region16
        $region15: #{residual_mlp.1} parent=11 // pred_region
          _
        $region16: #{residual_mlp.1} parent=11 // pred_fallthru
          _
        // Predicated region
        $region17: #{residual_mlp.1} parent=11 // pred_check
          %p209 = pneg %p81
        $region18: #{residual_mlp.1} parent=11 // pred_check_branch
          %211 = sbr.rel (%p209) target = $region20
        $region19: #{residual_mlp.1} parent=11 // pred_region
          _
        $region20: #{residual_mlp.1} parent=11 // pred_fallthru
          _
        // Predicated region
        $region21: #{residual_mlp.1} parent=11 // pred_check
          %p212 = pneg %p102
        $region22: #{residual_mlp.1} parent=11 // pred_check_branch
          %214 = sbr.rel (%p212) target = $region24
        $region23: #{residual_mlp.1} parent=11 // pred_region
          _
        $region24: #{residual_mlp.1} parent=11 // pred_fallthru
          _
        // Predicated region
        $region25: #{residual_mlp.1} parent=11 // pred_check
          %p215 = pneg %p123
        $region26: #{residual_mlp.1} parent=11 // pred_check_branch
          %217 = sbr.rel (%p215) target = $region28
        $region27: #{residual_mlp.1} parent=11 // pred_region
          _
        $region28: #{residual_mlp.1} parent=11 // pred_fallthru
          _
        // Predicated region
        $region29: #{residual_mlp.1} parent=11 // pred_check
          %p218 = pneg %p144
        $region30: #{residual_mlp.1} parent=11 // pred_check_branch
          %220 = sbr.rel (%p218) target = $region32
        $region31: #{residual_mlp.1} parent=11 // pred_region
          _
        $region32: #{residual_mlp.1} parent=11 // pred_fallthru
          _
        // Predicated region
        $region33: #{residual_mlp.1} parent=11 // pred_check
          %p221 = pneg %p165
        $region34: #{residual_mlp.1} parent=11 // pred_check_branch
          %223 = sbr.rel (%p221) target = $region36
        $region35: #{residual_mlp.1} parent=11 // pred_region
          _
        $region36: #{residual_mlp.1} parent=11 // pred_fallthru
          _
      $region12: #{residual_mlp.1} parent=5 // pred_fallthru
        _
      %p224 = scmp.lt.s32.totalorder %s13, 5
      // Predicated region
      $region37: #{residual_mlp.1} parent=5 // pred_check
        %p225 = pneg %p224
      $region38: #{residual_mlp.1} parent=5 // pred_check_branch
        %227 = sbr.rel (%p225) target = $region40
      $region39: #{residual_mlp.1} parent=5 // pred_region
        // Predicated region
        $region41: #{residual_mlp.1} parent=39 // pred_check
          %p228 = pneg %p33
        $region42: #{residual_mlp.1} parent=39 // pred_check_branch
          %230 = sbr.rel (%p228) target = $region44
        $region43: #{residual_mlp.1} parent=39 // pred_region
          %s231 = smul.u32 8, %s13
          %s232 = ssub.s32 33, %s231
          %p233 = scmp.lt.s32.totalorder %s232, 8
          %s234 = scalar_select %p233, %s232, 8
          %s235 = smul.u32 8, %s234
          %s236 = smul.u32 %s235, 2
          %p237 = scmp.lt.s32.totalorder %s231, 32
          %s238 = scalar_select %p237, %s231, 32
          %s239 = smul.addr %s238, 2
          %s240 = smul.addr %s239, 8
          %s241 = scalar_lea.vmem %s0, %s240
          %s242 = smul.u32 8, %s13
          %s243 = ssub.s32 33, %s242
          %p244 = scmp.lt.s32.totalorder %s243, 8
          %s245 = scalar_select %p244, %s243, 8
          %s246 = smul.u32 8, %s245
          %s247 = smul.u32 %s246, 2
        $region44: #{residual_mlp.1} parent=39 // pred_fallthru
          _
      $region40: #{residual_mlp.1} parent=5 // pred_fallthru
        _
      %p248 = scmp.le.s32.totalorder 1, %s13
      %p249 = scmp.lt.s32.totalorder %s13, 6
      %p250 = pnand %p248, %p249
      %p251 = pneg %p250
      // Predicated region
      $region45: #{residual_mlp.1} parent=5 // pred_check
        _
      $region46: #{residual_mlp.1} parent=5 // pred_check_branch
        %253 = sbr.rel (%p250) target = $region48
      $region47: #{residual_mlp.1} parent=5 // pred_region
        %s254 = ssub.s32 %s13, 1
        %s255 = smul.u32 8, %s18
        %s256 = ssub.s32 33, %s255
        %p257 = scmp.lt.s32.totalorder %s256, 8
        %s258 = scalar_select %p257, %s256, 8
        %s259 = smul.u32 8, %s258
        %s260 = smul.u32 %s259, 2
        %p261 = scmp.lt.s32.totalorder %s255, 32
        %s262 = scalar_select %p261, %s255, 32
        %s263 = smul.addr %s262, 2
        %s264 = smul.addr %s263, 8
        %s265 = scalar_lea.vmem %s0, %s264
        %p266 = pneg %p39
        %p267 = pneg %p36
        %p268 = pneg %p60
        %p269 = pneg %p57
        %p270 = pneg %p81
        %p271 = pneg %p78
        %p272 = pneg %p102
        %p273 = pneg %p99
        %p274 = pneg %p123
        %p275 = pneg %p120
        %p276 = pneg %p144
        %p277 = pneg %p141
        %p278 = pneg %p165
        %p279 = pneg %p162
        %p280 = pneg %p191
        %p281 = pneg %p188
        %s282 = sand.u32 %s178, 1
        %s283 = sand.u32 %s178, 1
        %s284 = smul.addr %s283, 64
        %s285 = scalar_lea.vmem [#allocation2], %s284
        %s286 = smul.u32 8, %s18
        %s287 = ssub.s32 33, %s286
        %p288 = scmp.lt.s32.totalorder %s287, 8
        %s289 = scalar_select %p288, %s287, 8
        %s290 = smul.u32 8, %s289
        %s291 = smul.u32 %s290, 2
        %p292 = scmp.lt.s32.totalorder %s286, 32
        %s293 = scalar_select %p292, %s286, 32
        %s294 = smul.addr %s293, 2
        %s295 = smul.addr %s294, 8
        %s296 = scalar_lea.vmem %s0, %s295
        %s297 = smul.u32 8, %s18
        %s298 = ssub.s32 33, %s297
        %p299 = scmp.lt.s32.totalorder %s298, 8
        %s300 = scalar_select %p299, %s298, 8
        %s301 = smul.u32 8, %s300
        %s302 = smul.u32 %s301, 2
        %s303 = smul.u32 8, %s18
        %s304 = ssub.s32 33, %s303
        %p305 = scmp.lt.s32.totalorder %s304, 8
        %s306 = scalar_select %p305, %s304, 8
        %s307 = smul.u32 8, %s306
        %v308 = vld [vmem:[%s296] sm:$0xff]
        %v309 = vld [vmem:[%s296 + $0x8] sm:$0xff]
        %v310 = vld [vmem:[%s296 + $0x10] sm:$0xff]
        %v311 = vld [vmem:[%s296 + $0x18] sm:$0xff]
        %v312 = vld [vmem:[%s296 + $0x20] sm:$0xff]
        %v313 = vld [vmem:[%s296 + $0x28] sm:$0xff]
        %v314 = vld [vmem:[%s296 + $0x30] sm:$0xff]
        %v315 = vld [vmem:[%s296 + $0x38] sm:$0xff]
        %v316 = vld [vmem:[%s296 + $0x40] sm:$0xff]
        %v317 = vld [vmem:[%s296 + $0x48] sm:$0xff]
        %v318 = vld [vmem:[%s296 + $0x50] sm:$0xff]
        %v319 = vld [vmem:[%s296 + $0x58] sm:$0xff]
        %v320 = vld [vmem:[%s296 + $0x60] sm:$0xff]
        %v321 = vld [vmem:[%s296 + $0x68] sm:$0xff]
        %v322 = vld [vmem:[%s296 + $0x70] sm:$0xff]
        %v323 = vld [vmem:[%s296 + $0x78] sm:$0xff]
        %v324 = vpack.c.bf16 %v310, %v308
        %v325 = vpack.c.bf16 %v311, %v309
        %v326 = vpack.c.bf16 %v314, %v312
        %v327 = vpack.c.bf16 %v315, %v313
        %v328 = vpack.c.bf16 %v318, %v316
        %v329 = vpack.c.bf16 %v319, %v317
        %v330 = vpack.c.bf16 %v322, %v320
        %v331 = vpack.c.bf16 %v323, %v321
        %v332 = vld [vmem:[%s1] sm:$0xff]
        %v333 = vld [vmem:[%s1 + $0x8] sm:$0xff]
        %v334 = vld [vmem:[%s1 + $0x10] sm:$0xff]
        %v335 = vld [vmem:[%s1 + $0x18] sm:$0xff]
        %v336 = vld [vmem:[%s1 + $0x20] sm:$0xff]
        %v337 = vld [vmem:[%s1 + $0x28] sm:$0xff]
        %v338 = vld [vmem:[%s1 + $0x30] sm:$0xff]
        %v339 = vld [vmem:[%s1 + $0x38] sm:$0xff]
        %v340 = vld [vmem:[%s1 + $0x40] sm:$0xff]
        %v341 = vld [vmem:[%s1 + $0x48] sm:$0xff]
        %v342 = vld [vmem:[%s1 + $0x50] sm:$0xff]
        %v343 = vld [vmem:[%s1 + $0x58] sm:$0xff]
        %v344 = vld [vmem:[%s1 + $0x60] sm:$0xff]
        %v345 = vld [vmem:[%s1 + $0x68] sm:$0xff]
        %v346 = vld [vmem:[%s1 + $0x70] sm:$0xff]
        %v347 = vld [vmem:[%s1 + $0x78] sm:$0xff]
        %v348 = vld [vmem:[%s1 + $0x80] sm:$0xff]
        %v349 = vld [vmem:[%s1 + $0x88] sm:$0xff]
        %v350 = vld [vmem:[%s1 + $0x90] sm:$0xff]
        %v351 = vld [vmem:[%s1 + $0x98] sm:$0xff]
        %v352 = vld [vmem:[%s1 + $0xa0] sm:$0xff]
        %v353 = vld [vmem:[%s1 + $0xa8] sm:$0xff]
        %v354 = vld [vmem:[%s1 + $0xb0] sm:$0xff]
        %v355 = vld [vmem:[%s1 + $0xb8] sm:$0xff]
        %v356 = vld [vmem:[%s1 + $0xc0] sm:$0xff]
        %v357 = vld [vmem:[%s1 + $0xc8] sm:$0xff]
        %v358 = vld [vmem:[%s1 + $0xd0] sm:$0xff]
        %v359 = vld [vmem:[%s1 + $0xd8] sm:$0xff]
        %v360 = vld [vmem:[%s1 + $0xe0] sm:$0xff]
        %v361 = vld [vmem:[%s1 + $0xe8] sm:$0xff]
        %v362 = vld [vmem:[%s1 + $0xf0] sm:$0xff]
        %v363 = vld [vmem:[%s1 + $0xf8] sm:$0xff]
        %v364 = vld [vmem:[%s1 + $0x100] sm:$0xff]
        %v365 = vld [vmem:[%s1 + $0x108] sm:$0xff]
        %v366 = vld [vmem:[%s1 + $0x110] sm:$0xff]
        %v367 = vld [vmem:[%s1 + $0x118] sm:$0xff]
        %v368 = vld [vmem:[%s1 + $0x120] sm:$0xff]
        %v369 = vld [vmem:[%s1 + $0x128] sm:$0xff]
        %v370 = vld [vmem:[%s1 + $0x130] sm:$0xff]
        %v371 = vld [vmem:[%s1 + $0x138] sm:$0xff]
        %v372 = vld [vmem:[%s1 + $0x140] sm:$0xff]
        %v373 = vld [vmem:[%s1 + $0x148] sm:$0xff]
        %v374 = vld [vmem:[%s1 + $0x150] sm:$0xff]
        %v375 = vld [vmem:[%s1 + $0x158] sm:$0xff]
        %v376 = vld [vmem:[%s1 + $0x160] sm:$0xff]
        %v377 = vld [vmem:[%s1 + $0x168] sm:$0xff]
        %v378 = vld [vmem:[%s1 + $0x170] sm:$0xff]
        %v379 = vld [vmem:[%s1 + $0x178] sm:$0xff]
        %v380 = vld [vmem:[%s1 + $0x180] sm:$0xff]
        %v381 = vld [vmem:[%s1 + $0x188] sm:$0xff]
        %v382 = vld [vmem:[%s1 + $0x190] sm:$0xff]
        %v383 = vld [vmem:[%s1 + $0x198] sm:$0xff]
        %v384 = vld [vmem:[%s1 + $0x1a0] sm:$0xff]
        %v385 = vld [vmem:[%s1 + $0x1a8] sm:$0xff]
        %v386 = vld [vmem:[%s1 + $0x1b0] sm:$0xff]
        %v387 = vld [vmem:[%s1 + $0x1b8] sm:$0xff]
        %v388 = vld [vmem:[%s1 + $0x1c0] sm:$0xff]
        %v389 = vld [vmem:[%s1 + $0x1c8] sm:$0xff]
        %v390 = vld [vmem:[%s1 + $0x1d0] sm:$0xff]
        %v391 = vld [vmem:[%s1 + $0x1d8] sm:$0xff]
        %v392 = vld [vmem:[%s1 + $0x1e0] sm:$0xff]
        %v393 = vld [vmem:[%s1 + $0x1e8] sm:$0xff]
        %v394 = vld [vmem:[%s1 + $0x1f0] sm:$0xff]
        %v395 = vld [vmem:[%s1 + $0x1f8] sm:$0xff]
        %v396 = vld [vmem:[%s2] sm:$0xf]
        %v398 = vperm.slane %v396, 0
        %v399 = vperm.slane %v396, 1
        %v400 = vperm.slane %v396, 2
        %v401 = vperm.slane %v396, 3
        %v470 = vunpack.c.l.b16 %v332
        %v471 = vunpack.c.h.b16 %v332
        %v472 = vunpack.c.l.b16 %v333
        %v473 = vunpack.c.h.b16 %v333
        %v474 = vunpack.c.l.b16 %v334
        %v475 = vunpack.c.h.b16 %v334
        %v476 = vunpack.c.l.b16 %v335
        %v477 = vunpack.c.h.b16 %v335
        %v478 = vunpack.c.l.b16 %v336
        %v479 = vunpack.c.h.b16 %v336
        %v480 = vunpack.c.l.b16 %v337
        %v481 = vunpack.c.h.b16 %v337
        %v482 = vunpack.c.l.b16 %v338
        %v483 = vunpack.c.h.b16 %v338
        %v484 = vunpack.c.l.b16 %v339
        %v485 = vunpack.c.h.b16 %v339
        %v486 = vunpack.c.l.b16 %v340
        %v487 = vunpack.c.h.b16 %v340
        %v488 = vunpack.c.l.b16 %v341
        %v489 = vunpack.c.h.b16 %v341
        %v490 = vunpack.c.l.b16 %v342
        %v491 = vunpack.c.h.b16 %v342
        %v492 = vunpack.c.l.b16 %v343
        %v493 = vunpack.c.h.b16 %v343
        %v494 = vunpack.c.l.b16 %v344
        %v495 = vunpack.c.h.b16 %v344
        %v496 = vunpack.c.l.b16 %v345
        %v497 = vunpack.c.h.b16 %v345
        %v498 = vunpack.c.l.b16 %v346
        %v499 = vunpack.c.h.b16 %v346
        %v500 = vunpack.c.l.b16 %v347
        %v501 = vunpack.c.h.b16 %v347
        %v502 = vunpack.c.l.b16 %v348
        %v503 = vunpack.c.h.b16 %v348
        %v504 = vunpack.c.l.b16 %v349
        %v505 = vunpack.c.h.b16 %v349
        %v506 = vunpack.c.l.b16 %v350
        %v507 = vunpack.c.h.b16 %v350
        %v508 = vunpack.c.l.b16 %v351
        %v509 = vunpack.c.h.b16 %v351
        %v510 = vunpack.c.l.b16 %v352
        %v511 = vunpack.c.h.b16 %v352
        %v512 = vunpack.c.l.b16 %v353
        %v513 = vunpack.c.h.b16 %v353
        %v514 = vunpack.c.l.b16 %v354
        %v515 = vunpack.c.h.b16 %v354
        %v516 = vunpack.c.l.b16 %v355
        %v517 = vunpack.c.h.b16 %v355
        %v518 = vunpack.c.l.b16 %v356
        %v519 = vunpack.c.h.b16 %v356
        %v520 = vunpack.c.l.b16 %v357
        %v521 = vunpack.c.h.b16 %v357
        %v522 = vunpack.c.l.b16 %v358
        %v523 = vunpack.c.h.b16 %v358
        %v524 = vunpack.c.l.b16 %v359
        %v525 = vunpack.c.h.b16 %v359
        %v526 = vunpack.c.l.b16 %v360
        %v527 = vunpack.c.h.b16 %v360
        %v528 = vunpack.c.l.b16 %v361
        %v529 = vunpack.c.h.b16 %v361
        %v530 = vunpack.c.l.b16 %v362
        %v531 = vunpack.c.h.b16 %v362
        %v532 = vunpack.c.l.b16 %v363
        %v533 = vunpack.c.h.b16 %v363
        %v534 = vunpack.c.l.b16 %v364
        %v535 = vunpack.c.h.b16 %v364
        %v536 = vunpack.c.l.b16 %v365
        %v537 = vunpack.c.h.b16 %v365
        %v538 = vunpack.c.l.b16 %v366
        %v539 = vunpack.c.h.b16 %v366
        %v540 = vunpack.c.l.b16 %v367
        %v541 = vunpack.c.h.b16 %v367
        %v542 = vunpack.c.l.b16 %v368
        %v543 = vunpack.c.h.b16 %v368
        %v544 = vunpack.c.l.b16 %v369
        %v545 = vunpack.c.h.b16 %v369
        %v546 = vunpack.c.l.b16 %v370
        %v547 = vunpack.c.h.b16 %v370
        %v548 = vunpack.c.l.b16 %v371
        %v549 = vunpack.c.h.b16 %v371
        %v550 = vunpack.c.l.b16 %v372
        %v551 = vunpack.c.h.b16 %v372
        %v552 = vunpack.c.l.b16 %v373
        %v553 = vunpack.c.h.b16 %v373
        %v554 = vunpack.c.l.b16 %v374
        %v555 = vunpack.c.h.b16 %v374
        %v556 = vunpack.c.l.b16 %v375
        %v557 = vunpack.c.h.b16 %v375
        %v558 = vunpack.c.l.b16 %v376
        %v559 = vunpack.c.h.b16 %v376
        %v560 = vunpack.c.l.b16 %v377
        %v561 = vunpack.c.h.b16 %v377
        %v562 = vunpack.c.l.b16 %v378
        %v563 = vunpack.c.h.b16 %v378
        %v564 = vunpack.c.l.b16 %v379
        %v565 = vunpack.c.h.b16 %v379
        %v566 = vunpack.c.l.b16 %v380
        %v567 = vunpack.c.h.b16 %v380
        %v568 = vunpack.c.l.b16 %v381
        %v569 = vunpack.c.h.b16 %v381
        %v570 = vunpack.c.l.b16 %v382
        %v571 = vunpack.c.h.b16 %v382
        %v572 = vunpack.c.l.b16 %v383
        %v573 = vunpack.c.h.b16 %v383
        %v574 = vunpack.c.l.b16 %v384
        %v575 = vunpack.c.h.b16 %v384
        %v576 = vunpack.c.l.b16 %v385
        %v577 = vunpack.c.h.b16 %v385
        %v578 = vunpack.c.l.b16 %v386
        %v579 = vunpack.c.h.b16 %v386
        %v580 = vunpack.c.l.b16 %v387
        %v581 = vunpack.c.h.b16 %v387
        %v582 = vunpack.c.l.b16 %v388
        %v583 = vunpack.c.h.b16 %v388
        %v584 = vunpack.c.l.b16 %v389
        %v585 = vunpack.c.h.b16 %v389
        %v586 = vunpack.c.l.b16 %v390
        %v587 = vunpack.c.h.b16 %v390
        %v588 = vunpack.c.l.b16 %v391
        %v589 = vunpack.c.h.b16 %v391
        %v590 = vunpack.c.l.b16 %v392
        %v591 = vunpack.c.h.b16 %v392
        %v592 = vunpack.c.l.b16 %v393
        %v593 = vunpack.c.h.b16 %v393
        %v594 = vunpack.c.l.b16 %v394
        %v595 = vunpack.c.h.b16 %v394
        %v596 = vunpack.c.l.b16 %v395
        %v597 = vunpack.c.h.b16 %v395
        %v598 = vpack.c.b16 %v474, %v470
        %v599 = vpack.c.b16 %v475, %v471
        %v600 = vpack.c.b16 %v476, %v472
        %v601 = vpack.c.b16 %v477, %v473
        %v602 = vpack.c.b16 %v482, %v478
        %v603 = vpack.c.b16 %v483, %v479
        %v604 = vpack.c.b16 %v484, %v480
        %v605 = vpack.c.b16 %v485, %v481
        %v606 = vpack.c.b16 %v490, %v486
        %v607 = vpack.c.b16 %v491, %v487
        %v608 = vpack.c.b16 %v492, %v488
        %v609 = vpack.c.b16 %v493, %v489
        %v610 = vpack.c.b16 %v498, %v494
        %v611 = vpack.c.b16 %v499, %v495
        %v612 = vpack.c.b16 %v500, %v496
        %v613 = vpack.c.b16 %v501, %v497
        %v614 = vpack.c.b16 %v506, %v502
        %v615 = vpack.c.b16 %v507, %v503
        %v616 = vpack.c.b16 %v508, %v504
        %v617 = vpack.c.b16 %v509, %v505
        %v618 = vpack.c.b16 %v514, %v510
        %v619 = vpack.c.b16 %v515, %v511
        %v620 = vpack.c.b16 %v516, %v512
        %v621 = vpack.c.b16 %v517, %v513
        %v622 = vpack.c.b16 %v522, %v518
        %v623 = vpack.c.b16 %v523, %v519
        %v624 = vpack.c.b16 %v524, %v520
        %v625 = vpack.c.b16 %v525, %v521
        %v626 = vpack.c.b16 %v530, %v526
        %v627 = vpack.c.b16 %v531, %v527
        %v628 = vpack.c.b16 %v532, %v528
        %v629 = vpack.c.b16 %v533, %v529
        %v630 = vpack.c.b16 %v538, %v534
        %v631 = vpack.c.b16 %v539, %v535
        %v632 = vpack.c.b16 %v540, %v536
        %v633 = vpack.c.b16 %v541, %v537
        %v634 = vpack.c.b16 %v546, %v542
        %v635 = vpack.c.b16 %v547, %v543
        %v636 = vpack.c.b16 %v548, %v544
        %v637 = vpack.c.b16 %v549, %v545
        %v638 = vpack.c.b16 %v554, %v550
        %v639 = vpack.c.b16 %v555, %v551
        %v640 = vpack.c.b16 %v556, %v552
        %v641 = vpack.c.b16 %v557, %v553
        %v642 = vpack.c.b16 %v562, %v558
        %v643 = vpack.c.b16 %v563, %v559
        %v644 = vpack.c.b16 %v564, %v560
        %v645 = vpack.c.b16 %v565, %v561
        %v646 = vpack.c.b16 %v570, %v566
        %v647 = vpack.c.b16 %v571, %v567
        %v648 = vpack.c.b16 %v572, %v568
        %v649 = vpack.c.b16 %v573, %v569
        %v650 = vpack.c.b16 %v578, %v574
        %v651 = vpack.c.b16 %v579, %v575
        %v652 = vpack.c.b16 %v580, %v576
        %v653 = vpack.c.b16 %v581, %v577
        %v654 = vpack.c.b16 %v586, %v582
        %v655 = vpack.c.b16 %v587, %v583
        %v656 = vpack.c.b16 %v588, %v584
        %v657 = vpack.c.b16 %v589, %v585
        %v658 = vpack.c.b16 %v594, %v590
        %v659 = vpack.c.b16 %v595, %v591
        %v660 = vpack.c.b16 %v596, %v592
        %v661 = vpack.c.b16 %v597, %v593
        %726 = vmatpush.bf16.msra.mxu0 %v626
        %727 = vmatpush.bf16.msra.mxu0 %v622
        %728 = vmatpush.bf16.msra.mxu0 %v618
        %729 = vmatpush.bf16.msra.mxu0 %v614
        %730 = vmatpush.bf16.msra.mxu0 %v610
        %731 = vmatpush.bf16.msra.mxu0 %v606
        %732 = vmatpush.bf16.msra.mxu0 %v602
        %733 = vmatpush.bf16.msra.mxu0 %v598
        %734 = vmatmul.bf16.gmra.mxu0 %v324
        %v735 = vpop.f32.mrf.mxu0
        %v736 = vadd.f32 %v398, %v735
        %v737 = vpop.f32.mrf.mxu0
        %v738 = vadd.f32 %v398, %v737
        %739 = vmatmul.bf16.gmra.mxu0 %v326
        %v740 = vpop.f32.mrf.mxu0
        %v741 = vadd.f32 %v398, %v740
        %v742 = vpop.f32.mrf.mxu0
        %v743 = vadd.f32 %v398, %v742
        %744 = vmatmul.bf16.gmra.mxu0 %v328
        %v745 = vpop.f32.mrf.mxu0
        %v746 = vadd.f32 %v398, %v745
        %v747 = vpop.f32.mrf.mxu0
        %v748 = vadd.f32 %v398, %v747
        %749 = vmatmul.bf16.gmra.mxu0 %v330
        %v750 = vpop.f32.mrf.mxu0
        %v751 = vadd.f32 %v398, %v750
        %v752 = vpop.f32.mrf.mxu0
        %v753 = vadd.f32 %v398, %v752
        %754 = vdwg.mxu0
        %755 = vmatpush.bf16.msra.mxu0 %v658
        %756 = vmatpush.bf16.msra.mxu0 %v654
        %757 = vmatpush.bf16.msra.mxu0 %v650
        %758 = vmatpush.bf16.msra.mxu0 %v646
        %759 = vmatpush.bf16.msra.mxu0 %v642
        %760 = vmatpush.bf16.msra.mxu0 %v638
        %761 = vmatpush.bf16.msra.mxu0 %v634
        %762 = vmatpush.bf16.msra.mxu0 %v630
        %763 = vmatmul.bf16.gmra.mxu0 %v325
        %v764 = vpop.f32.mrf.mxu0
        %v765 = vadd.f32 %v736, %v764
        %v766 = vpop.f32.mrf.mxu0
        %v767 = vadd.f32 %v738, %v766
        %768 = vmatmul.bf16.gmra.mxu0 %v327
        %v769 = vpop.f32.mrf.mxu0
        %v770 = vadd.f32 %v741, %v769
        %v771 = vpop.f32.mrf.mxu0
        %v772 = vadd.f32 %v743, %v771
        %773 = vmatmul.bf16.gmra.mxu0 %v329
        %v774 = vpop.f32.mrf.mxu0
        %v775 = vadd.f32 %v746, %v774
        %v776 = vpop.f32.mrf.mxu0
        %v777 = vadd.f32 %v748, %v776
        %778 = vmatmul.bf16.gmra.mxu0 %v331
        %v779 = vpop.f32.mrf.mxu0
        %v780 = vadd.f32 %v751, %v779
        %v781 = vpop.f32.mrf.mxu0
        %v782 = vadd.f32 %v753, %v781
        %783 = vdwg.mxu0
        %784 = vmatpush.bf16.msra.mxu0 %v627
        %785 = vmatpush.bf16.msra.mxu0 %v623
        %786 = vmatpush.bf16.msra.mxu0 %v619
        %787 = vmatpush.bf16.msra.mxu0 %v615
        %788 = vmatpush.bf16.msra.mxu0 %v611
        %789 = vmatpush.bf16.msra.mxu0 %v607
        %790 = vmatpush.bf16.msra.mxu0 %v603
        %791 = vmatpush.bf16.msra.mxu0 %v599
        %792 = vmatmul.bf16.gmra.mxu0 %v324
        %v793 = vpop.f32.mrf.mxu0
        %v794 = vadd.f32 %v399, %v793
        %v795 = vpop.f32.mrf.mxu0
        %v796 = vadd.f32 %v399, %v795
        %797 = vmatmul.bf16.gmra.mxu0 %v326
        %v798 = vpop.f32.mrf.mxu0
        %v799 = vadd.f32 %v399, %v798
        %v800 = vpop.f32.mrf.mxu0
        %v801 = vadd.f32 %v399, %v800
        %802 = vmatmul.bf16.gmra.mxu0 %v328
        %v803 = vpop.f32.mrf.mxu0
        %v804 = vadd.f32 %v399, %v803
        %v805 = vpop.f32.mrf.mxu0
        %v806 = vadd.f32 %v399, %v805
        %807 = vmatmul.bf16.gmra.mxu0 %v330
        %v808 = vpop.f32.mrf.mxu0
        %v809 = vadd.f32 %v399, %v808
        %v810 = vpop.f32.mrf.mxu0
        %v811 = vadd.f32 %v399, %v810
        %812 = vdwg.mxu0
        %813 = vmatpush.bf16.msra.mxu0 %v659
        %814 = vmatpush.bf16.msra.mxu0 %v655
        %815 = vmatpush.bf16.msra.mxu0 %v651
        %816 = vmatpush.bf16.msra.mxu0 %v647
        %817 = vmatpush.bf16.msra.mxu0 %v643
        %818 = vmatpush.bf16.msra.mxu0 %v639
        %819 = vmatpush.bf16.msra.mxu0 %v635
        %820 = vmatpush.bf16.msra.mxu0 %v631
        %821 = vmatmul.bf16.gmra.mxu0 %v325
        %v822 = vpop.f32.mrf.mxu0
        %v823 = vadd.f32 %v794, %v822
        %v824 = vpop.f32.mrf.mxu0
        %v825 = vadd.f32 %v796, %v824
        %826 = vmatmul.bf16.gmra.mxu0 %v327
        %v827 = vpop.f32.mrf.mxu0
        %v828 = vadd.f32 %v799, %v827
        %v829 = vpop.f32.mrf.mxu0
        %v830 = vadd.f32 %v801, %v829
        %831 = vmatmul.bf16.gmra.mxu0 %v329
        %v832 = vpop.f32.mrf.mxu0
        %v833 = vadd.f32 %v804, %v832
        %v834 = vpop.f32.mrf.mxu0
        %v835 = vadd.f32 %v806, %v834
        %836 = vmatmul.bf16.gmra.mxu0 %v331
        %v837 = vpop.f32.mrf.mxu0
        %v838 = vadd.f32 %v809, %v837
        %v839 = vpop.f32.mrf.mxu0
        %v840 = vadd.f32 %v811, %v839
        %841 = vdwg.mxu0
        %842 = vmatpush.bf16.msra.mxu0 %v628
        %843 = vmatpush.bf16.msra.mxu0 %v624
        %844 = vmatpush.bf16.msra.mxu0 %v620
        %845 = vmatpush.bf16.msra.mxu0 %v616
        %846 = vmatpush.bf16.msra.mxu0 %v612
        %847 = vmatpush.bf16.msra.mxu0 %v608
        %848 = vmatpush.bf16.msra.mxu0 %v604
        %849 = vmatpush.bf16.msra.mxu0 %v600
        %850 = vmatmul.bf16.gmra.mxu0 %v324
        %v851 = vpop.f32.mrf.mxu0
        %v852 = vadd.f32 %v400, %v851
        %v853 = vpop.f32.mrf.mxu0
        %v854 = vadd.f32 %v400, %v853
        %855 = vmatmul.bf16.gmra.mxu0 %v326
        %v856 = vpop.f32.mrf.mxu0
        %v857 = vadd.f32 %v400, %v856
        %v858 = vpop.f32.mrf.mxu0
        %v859 = vadd.f32 %v400, %v858
        %860 = vmatmul.bf16.gmra.mxu0 %v328
        %v861 = vpop.f32.mrf.mxu0
        %v862 = vadd.f32 %v400, %v861
        %v863 = vpop.f32.mrf.mxu0
        %v864 = vadd.f32 %v400, %v863
        %865 = vmatmul.bf16.gmra.mxu0 %v330
        %v866 = vpop.f32.mrf.mxu0
        %v867 = vadd.f32 %v400, %v866
        %v868 = vpop.f32.mrf.mxu0
        %v869 = vadd.f32 %v400, %v868
        %870 = vdwg.mxu0
        %871 = vmatpush.bf16.msra.mxu0 %v660
        %872 = vmatpush.bf16.msra.mxu0 %v656
        %873 = vmatpush.bf16.msra.mxu0 %v652
        %874 = vmatpush.bf16.msra.mxu0 %v648
        %875 = vmatpush.bf16.msra.mxu0 %v644
        %876 = vmatpush.bf16.msra.mxu0 %v640
        %877 = vmatpush.bf16.msra.mxu0 %v636
        %878 = vmatpush.bf16.msra.mxu0 %v632
        %879 = vmatmul.bf16.gmra.mxu0 %v325
        %v880 = vpop.f32.mrf.mxu0
        %v881 = vadd.f32 %v852, %v880
        %v882 = vpop.f32.mrf.mxu0
        %v883 = vadd.f32 %v854, %v882
        %884 = vmatmul.bf16.gmra.mxu0 %v327
        %v885 = vpop.f32.mrf.mxu0
        %v886 = vadd.f32 %v857, %v885
        %v887 = vpop.f32.mrf.mxu0
        %v888 = vadd.f32 %v859, %v887
        %889 = vmatmul.bf16.gmra.mxu0 %v329
        %v890 = vpop.f32.mrf.mxu0
        %v891 = vadd.f32 %v862, %v890
        %v892 = vpop.f32.mrf.mxu0
        %v893 = vadd.f32 %v864, %v892
        %894 = vmatmul.bf16.gmra.mxu0 %v331
        %v895 = vpop.f32.mrf.mxu0
        %v896 = vadd.f32 %v867, %v895
        %v897 = vpop.f32.mrf.mxu0
        %v898 = vadd.f32 %v869, %v897
        %899 = vdwg.mxu0
        %900 = vmatpush.bf16.msra.mxu0 %v629
        %901 = vmatpush.bf16.msra.mxu0 %v625
        %902 = vmatpush.bf16.msra.mxu0 %v621
        %903 = vmatpush.bf16.msra.mxu0 %v617
        %904 = vmatpush.bf16.msra.mxu0 %v613
        %905 = vmatpush.bf16.msra.mxu0 %v609
        %906 = vmatpush.bf16.msra.mxu0 %v605
        %907 = vmatpush.bf16.msra.mxu0 %v601
        %908 = vmatmul.bf16.gmra.mxu0 %v324
        %v909 = vpop.f32.mrf.mxu0
        %v910 = vadd.f32 %v401, %v909
        %v911 = vpop.f32.mrf.mxu0
        %v912 = vadd.f32 %v401, %v911
        %913 = vmatmul.bf16.gmra.mxu0 %v326
        %v914 = vpop.f32.mrf.mxu0
        %v915 = vadd.f32 %v401, %v914
        %v916 = vpop.f32.mrf.mxu0
        %v917 = vadd.f32 %v401, %v916
        %918 = vmatmul.bf16.gmra.mxu0 %v328
        %v919 = vpop.f32.mrf.mxu0
        %v920 = vadd.f32 %v401, %v919
        %v921 = vpop.f32.mrf.mxu0
        %v922 = vadd.f32 %v401, %v921
        %923 = vmatmul.bf16.gmra.mxu0 %v330
        %v924 = vpop.f32.mrf.mxu0
        %v925 = vadd.f32 %v401, %v924
        %v926 = vpop.f32.mrf.mxu0
        %v927 = vadd.f32 %v401, %v926
        %928 = vdwg.mxu0
        %929 = vmatpush.bf16.msra.mxu0 %v661
        %930 = vmatpush.bf16.msra.mxu0 %v657
        %931 = vmatpush.bf16.msra.mxu0 %v653
        %932 = vmatpush.bf16.msra.mxu0 %v649
        %933 = vmatpush.bf16.msra.mxu0 %v645
        %934 = vmatpush.bf16.msra.mxu0 %v641
        %935 = vmatpush.bf16.msra.mxu0 %v637
        %936 = vmatpush.bf16.msra.mxu0 %v633
        %937 = vmatmul.bf16.gmra.mxu0 %v325
        %v938 = vpop.f32.mrf.mxu0
        %v939 = vadd.f32 %v910, %v938
        %v940 = vpop.f32.mrf.mxu0
        %v941 = vadd.f32 %v912, %v940
        %942 = vmatmul.bf16.gmra.mxu0 %v327
        %v943 = vpop.f32.mrf.mxu0
        %v944 = vadd.f32 %v915, %v943
        %v945 = vpop.f32.mrf.mxu0
        %v946 = vadd.f32 %v917, %v945
        %947 = vmatmul.bf16.gmra.mxu0 %v329
        %v948 = vpop.f32.mrf.mxu0
        %v949 = vadd.f32 %v920, %v948
        %v950 = vpop.f32.mrf.mxu0
        %v951 = vadd.f32 %v922, %v950
        %952 = vmatmul.bf16.gmra.mxu0 %v331
        %v953 = vpop.f32.mrf.mxu0
        %v954 = vadd.f32 %v925, %v953
        %v955 = vpop.f32.mrf.mxu0
        %v956 = vadd.f32 %v927, %v955
        %957 = vdwg.mxu0
        %v958 = vsub.f32 0.0, %v765
        %v959 = vsub.f32 0.0, %v823
        %v960 = vsub.f32 0.0, %v881
        %v961 = vsub.f32 0.0, %v939
        %v962 = vsub.f32 0.0, %v767
        %v963 = vsub.f32 0.0, %v825
        %v964 = vsub.f32 0.0, %v883
        %v965 = vsub.f32 0.0, %v941
        %v966 = vsub.f32 0.0, %v770
        %v967 = vsub.f32 0.0, %v828
        %v968 = vsub.f32 0.0, %v886
        %v969 = vsub.f32 0.0, %v944
        %v970 = vsub.f32 0.0, %v772
        %v971 = vsub.f32 0.0, %v830
        %v972 = vsub.f32 0.0, %v888
        %v973 = vsub.f32 0.0, %v946
        %v974 = vsub.f32 0.0, %v775
        %v975 = vsub.f32 0.0, %v833
        %v976 = vsub.f32 0.0, %v891
        %v977 = vsub.f32 0.0, %v949
        %v978 = vsub.f32 0.0, %v777
        %v979 = vsub.f32 0.0, %v835
        %v980 = vsub.f32 0.0, %v893
        %v981 = vsub.f32 0.0, %v951
        %v982 = vsub.f32 0.0, %v780
        %v983 = vsub.f32 0.0, %v838
        %v984 = vsub.f32 0.0, %v896
        %v985 = vsub.f32 0.0, %v954
        %v986 = vsub.f32 0.0, %v782
        %v987 = vsub.f32 0.0, %v840
        %v988 = vsub.f32 0.0, %v898
        %v989 = vsub.f32 0.0, %v956
        %v990 = vmul.f32 %v958, 1.442695
        %v991 = vpow.pop %v990
        %v992 = vmul.f32 %v959, 1.442695
        %v993 = vpow.pop %v992
        %v994 = vmul.f32 %v960, 1.442695
        %v995 = vpow.pop %v994
        %v996 = vmul.f32 %v961, 1.442695
        %v997 = vpow.pop %v996
        %v998 = vmul.f32 %v962, 1.442695
        %v999 = vpow.pop %v998
        %v1000 = vmul.f32 %v963, 1.442695
        %v1001 = vpow.pop %v1000
        %v1002 = vmul.f32 %v964, 1.442695
        %v1003 = vpow.pop %v1002
        %v1004 = vmul.f32 %v965, 1.442695
        %v1005 = vpow.pop %v1004
        %v1006 = vmul.f32 %v966, 1.442695
        %v1007 = vpow.pop %v1006
        %v1008 = vmul.f32 %v967, 1.442695
        %v1009 = vpow.pop %v1008
        %v1010 = vmul.f32 %v968, 1.442695
        %v1011 = vpow.pop %v1010
        %v1012 = vmul.f32 %v969, 1.442695
        %v1013 = vpow.pop %v1012
        %v1014 = vmul.f32 %v970, 1.442695
        %v1015 = vpow.pop %v1014
        %v1016 = vmul.f32 %v971, 1.442695
        %v1017 = vpow.pop %v1016
        %v1018 = vmul.f32 %v972, 1.442695
        %v1019 = vpow.pop %v1018
        %v1020 = vmul.f32 %v973, 1.442695
        %v1021 = vpow.pop %v1020
        %v1022 = vmul.f32 %v974, 1.442695
        %v1023 = vpow.pop %v1022
        %v1024 = vmul.f32 %v975, 1.442695
        %v1025 = vpow.pop %v1024
        %v1026 = vmul.f32 %v976, 1.442695
        %v1027 = vpow.pop %v1026
        %v1028 = vmul.f32 %v977, 1.442695
        %v1029 = vpow.pop %v1028
        %v1030 = vmul.f32 %v978, 1.442695
        %v1031 = vpow.pop %v1030
        %v1032 = vmul.f32 %v979, 1.442695
        %v1033 = vpow.pop %v1032
        %v1034 = vmul.f32 %v980, 1.442695
        %v1035 = vpow.pop %v1034
        %v1036 = vmul.f32 %v981, 1.442695
        %v1037 = vpow.pop %v1036
        %v1038 = vmul.f32 %v982, 1.442695
        %v1039 = vpow.pop %v1038
        %v1040 = vmul.f32 %v983, 1.442695
        %v1041 = vpow.pop %v1040
        %v1042 = vmul.f32 %v984, 1.442695
        %v1043 = vpow.pop %v1042
        %v1044 = vmul.f32 %v985, 1.442695
        %v1045 = vpow.pop %v1044
        %v1046 = vmul.f32 %v986, 1.442695
        %v1047 = vpow.pop %v1046
        %v1048 = vmul.f32 %v987, 1.442695
        %v1049 = vpow.pop %v1048
        %v1050 = vmul.f32 %v988, 1.442695
        %v1051 = vpow.pop %v1050
        %v1052 = vmul.f32 %v989, 1.442695
        %v1053 = vpow.pop %v1052
        %v1054 = vadd.f32 %v991, 1.0
        %v1055 = vadd.f32 %v993, 1.0
        %v1056 = vadd.f32 %v995, 1.0
        %v1057 = vadd.f32 %v997, 1.0
        %v1058 = vadd.f32 %v999, 1.0
        %v1059 = vadd.f32 %v1001, 1.0
        %v1060 = vadd.f32 %v1003, 1.0
        %v1061 = vadd.f32 %v1005, 1.0
        %v1062 = vadd.f32 %v1007, 1.0
        %v1063 = vadd.f32 %v1009, 1.0
        %v1064 = vadd.f32 %v1011, 1.0
        %v1065 = vadd.f32 %v1013, 1.0
        %v1066 = vadd.f32 %v1015, 1.0
        %v1067 = vadd.f32 %v1017, 1.0
        %v1068 = vadd.f32 %v1019, 1.0
        %v1069 = vadd.f32 %v1021, 1.0
        %v1070 = vadd.f32 %v1023, 1.0
        %v1071 = vadd.f32 %v1025, 1.0
        %v1072 = vadd.f32 %v1027, 1.0
        %v1073 = vadd.f32 %v1029, 1.0
        %v1074 = vadd.f32 %v1031, 1.0
        %v1075 = vadd.f32 %v1033, 1.0
        %v1076 = vadd.f32 %v1035, 1.0
        %v1077 = vadd.f32 %v1037, 1.0
        %v1078 = vadd.f32 %v1039, 1.0
        %v1079 = vadd.f32 %v1041, 1.0
        %v1080 = vadd.f32 %v1043, 1.0
        %v1081 = vadd.f32 %v1045, 1.0
        %v1082 = vadd.f32 %v1047, 1.0
        %v1083 = vadd.f32 %v1049, 1.0
        %v1084 = vadd.f32 %v1051, 1.0
        %v1085 = vadd.f32 %v1053, 1.0
        %v1086 = vrcp.pop %v1054
        %v1087 = vrcp.pop %v1055
        %v1088 = vrcp.pop %v1056
        %v1089 = vrcp.pop %v1057
        %v1090 = vrcp.pop %v1058
        %v1091 = vrcp.pop %v1059
        %v1092 = vrcp.pop %v1060
        %v1093 = vrcp.pop %v1061
        %v1094 = vrcp.pop %v1062
        %v1095 = vrcp.pop %v1063
        %v1096 = vrcp.pop %v1064
        %v1097 = vrcp.pop %v1065
        %v1098 = vrcp.pop %v1066
        %v1099 = vrcp.pop %v1067
        %v1100 = vrcp.pop %v1068
        %v1101 = vrcp.pop %v1069
        %v1102 = vrcp.pop %v1070
        %v1103 = vrcp.pop %v1071
        %v1104 = vrcp.pop %v1072
        %v1105 = vrcp.pop %v1073
        %v1106 = vrcp.pop %v1074
        %v1107 = vrcp.pop %v1075
        %v1108 = vrcp.pop %v1076
        %v1109 = vrcp.pop %v1077
        %v1110 = vrcp.pop %v1078
        %v1111 = vrcp.pop %v1079
        %v1112 = vrcp.pop %v1080
        %v1113 = vrcp.pop %v1081
        %v1114 = vrcp.pop %v1082
        %v1115 = vrcp.pop %v1083
        %v1116 = vrcp.pop %v1084
        %v1117 = vrcp.pop %v1085
        %v1118 = vmul.f32 %v765, %v1086
        %v1119 = vmul.f32 %v823, %v1087
        %v1120 = vmul.f32 %v881, %v1088
        %v1121 = vmul.f32 %v939, %v1089
        %v1122 = vmul.f32 %v767, %v1090
        %v1123 = vmul.f32 %v825, %v1091
        %v1124 = vmul.f32 %v883, %v1092
        %v1125 = vmul.f32 %v941, %v1093
        %v1126 = vmul.f32 %v770, %v1094
        %v1127 = vmul.f32 %v828, %v1095
        %v1128 = vmul.f32 %v886, %v1096
        %v1129 = vmul.f32 %v944, %v1097
        %v1130 = vmul.f32 %v772, %v1098
        %v1131 = vmul.f32 %v830, %v1099
        %v1132 = vmul.f32 %v888, %v1100
        %v1133 = vmul.f32 %v946, %v1101
        %v1134 = vmul.f32 %v775, %v1102
        %v1135 = vmul.f32 %v833, %v1103
        %v1136 = vmul.f32 %v891, %v1104
        %v1137 = vmul.f32 %v949, %v1105
        %v1138 = vmul.f32 %v777, %v1106
        %v1139 = vmul.f32 %v835, %v1107
        %v1140 = vmul.f32 %v893, %v1108
        %v1141 = vmul.f32 %v951, %v1109
        %v1142 = vmul.f32 %v780, %v1110
        %v1143 = vmul.f32 %v838, %v1111
        %v1144 = vmul.f32 %v896, %v1112
        %v1145 = vmul.f32 %v954, %v1113
        %v1146 = vmul.f32 %v782, %v1114
        %v1147 = vmul.f32 %v840, %v1115
        %v1148 = vmul.f32 %v898, %v1116
        %v1149 = vmul.f32 %v956, %v1117
        %v1150 = vpack.c.bf16 %v1122, %v1118
        %v1151 = vpack.c.bf16 %v1123, %v1119
        %v1152 = vpack.c.bf16 %v1124, %v1120
        %v1153 = vpack.c.bf16 %v1125, %v1121
        %v1154 = vpack.c.bf16 %v1130, %v1126
        %v1155 = vpack.c.bf16 %v1131, %v1127
        %v1156 = vpack.c.bf16 %v1132, %v1128
        %v1157 = vpack.c.bf16 %v1133, %v1129
        %v1158 = vpack.c.bf16 %v1138, %v1134
        %v1159 = vpack.c.bf16 %v1139, %v1135
        %v1160 = vpack.c.bf16 %v1140, %v1136
        %v1161 = vpack.c.bf16 %v1141, %v1137
        %v1162 = vpack.c.bf16 %v1146, %v1142
        %v1163 = vpack.c.bf16 %v1147, %v1143
        %v1164 = vpack.c.bf16 %v1148, %v1144
        %v1165 = vpack.c.bf16 %v1149, %v1145
        %v1166 = vld [vmem:[%s3] sm:$0xff]
        %v1167 = vld [vmem:[%s3 + $0x8] sm:$0xff]
        %v1168 = vld [vmem:[%s3 + $0x10] sm:$0xff]
        %v1169 = vld [vmem:[%s3 + $0x18] sm:$0xff]
        %v1170 = vld [vmem:[%s3 + $0x20] sm:$0xff]
        %v1171 = vld [vmem:[%s3 + $0x28] sm:$0xff]
        %v1172 = vld [vmem:[%s3 + $0x30] sm:$0xff]
        %v1173 = vld [vmem:[%s3 + $0x38] sm:$0xff]
        %v1174 = vld [vmem:[%s3 + $0x40] sm:$0xff]
        %v1175 = vld [vmem:[%s3 + $0x48] sm:$0xff]
        %v1176 = vld [vmem:[%s3 + $0x50] sm:$0xff]
        %v1177 = vld [vmem:[%s3 + $0x58] sm:$0xff]
        %v1178 = vld [vmem:[%s3 + $0x60] sm:$0xff]
        %v1179 = vld [vmem:[%s3 + $0x68] sm:$0xff]
        %v1180 = vld [vmem:[%s3 + $0x70] sm:$0xff]
        %v1181 = vld [vmem:[%s3 + $0x78] sm:$0xff]
        %v1182 = vld [vmem:[%s3 + $0x80] sm:$0xff]
        %v1183 = vld [vmem:[%s3 + $0x88] sm:$0xff]
        %v1184 = vld [vmem:[%s3 + $0x90] sm:$0xff]
        %v1185 = vld [vmem:[%s3 + $0x98] sm:$0xff]
        %v1186 = vld [vmem:[%s3 + $0xa0] sm:$0xff]
        %v1187 = vld [vmem:[%s3 + $0xa8] sm:$0xff]
        %v1188 = vld [vmem:[%s3 + $0xb0] sm:$0xff]
        %v1189 = vld [vmem:[%s3 + $0xb8] sm:$0xff]
        %v1190 = vld [vmem:[%s3 + $0xc0] sm:$0xff]
        %v1191 = vld [vmem:[%s3 + $0xc8] sm:$0xff]
        %v1192 = vld [vmem:[%s3 + $0xd0] sm:$0xff]
        %v1193 = vld [vmem:[%s3 + $0xd8] sm:$0xff]
        %v1194 = vld [vmem:[%s3 + $0xe0] sm:$0xff]
        %v1195 = vld [vmem:[%s3 + $0xe8] sm:$0xff]
        %v1196 = vld [vmem:[%s3 + $0xf0] sm:$0xff]
        %v1197 = vld [vmem:[%s3 + $0xf8] sm:$0xff]
        %v1198 = vld [vmem:[%s3 + $0x100] sm:$0xff]
        %v1199 = vld [vmem:[%s3 + $0x108] sm:$0xff]
        %v1200 = vld [vmem:[%s3 + $0x110] sm:$0xff]
        %v1201 = vld [vmem:[%s3 + $0x118] sm:$0xff]
        %v1202 = vld [vmem:[%s3 + $0x120] sm:$0xff]
        %v1203 = vld [vmem:[%s3 + $0x128] sm:$0xff]
        %v1204 = vld [vmem:[%s3 + $0x130] sm:$0xff]
        %v1205 = vld [vmem:[%s3 + $0x138] sm:$0xff]
        %v1206 = vld [vmem:[%s3 + $0x140] sm:$0xff]
        %v1207 = vld [vmem:[%s3 + $0x148] sm:$0xff]
        %v1208 = vld [vmem:[%s3 + $0x150] sm:$0xff]
        %v1209 = vld [vmem:[%s3 + $0x158] sm:$0xff]
        %v1210 = vld [vmem:[%s3 + $0x160] sm:$0xff]
        %v1211 = vld [vmem:[%s3 + $0x168] sm:$0xff]
        %v1212 = vld [vmem:[%s3 + $0x170] sm:$0xff]
        %v1213 = vld [vmem:[%s3 + $0x178] sm:$0xff]
        %v1214 = vld [vmem:[%s3 + $0x180] sm:$0xff]
        %v1215 = vld [vmem:[%s3 + $0x188] sm:$0xff]
        %v1216 = vld [vmem:[%s3 + $0x190] sm:$0xff]
        %v1217 = vld [vmem:[%s3 + $0x198] sm:$0xff]
        %v1218 = vld [vmem:[%s3 + $0x1a0] sm:$0xff]
        %v1219 = vld [vmem:[%s3 + $0x1a8] sm:$0xff]
        %v1220 = vld [vmem:[%s3 + $0x1b0] sm:$0xff]
        %v1221 = vld [vmem:[%s3 + $0x1b8] sm:$0xff]
        %v1222 = vld [vmem:[%s3 + $0x1c0] sm:$0xff]
        %v1223 = vld [vmem:[%s3 + $0x1c8] sm:$0xff]
        %v1224 = vld [vmem:[%s3 + $0x1d0] sm:$0xff]
        %v1225 = vld [vmem:[%s3 + $0x1d8] sm:$0xff]
        %v1226 = vld [vmem:[%s3 + $0x1e0] sm:$0xff]
        %v1227 = vld [vmem:[%s3 + $0x1e8] sm:$0xff]
        %v1228 = vld [vmem:[%s3 + $0x1f0] sm:$0xff]
        %v1229 = vld [vmem:[%s3 + $0x1f8] sm:$0xff]
        %v1230 = vld [vmem:[%s3 + $0x200] sm:$0xff]
        %v1231 = vld [vmem:[%s3 + $0x208] sm:$0xff]
        %v1232 = vld [vmem:[%s3 + $0x210] sm:$0xff]
        %v1233 = vld [vmem:[%s3 + $0x218] sm:$0xff]
        %v1234 = vld [vmem:[%s3 + $0x220] sm:$0xff]
        %v1235 = vld [vmem:[%s3 + $0x228] sm:$0xff]
        %v1236 = vld [vmem:[%s3 + $0x230] sm:$0xff]
        %v1237 = vld [vmem:[%s3 + $0x238] sm:$0xff]
        %v1238 = vld [vmem:[%s3 + $0x240] sm:$0xff]
        %v1239 = vld [vmem:[%s3 + $0x248] sm:$0xff]
        %v1240 = vld [vmem:[%s3 + $0x250] sm:$0xff]
        %v1241 = vld [vmem:[%s3 + $0x258] sm:$0xff]
        %v1242 = vld [vmem:[%s3 + $0x260] sm:$0xff]
        %v1243 = vld [vmem:[%s3 + $0x268] sm:$0xff]
        %v1244 = vld [vmem:[%s3 + $0x270] sm:$0xff]
        %v1245 = vld [vmem:[%s3 + $0x278] sm:$0xff]
        %v1246 = vld [vmem:[%s3 + $0x280] sm:$0xff]
        %v1247 = vld [vmem:[%s3 + $0x288] sm:$0xff]
        %v1248 = vld [vmem:[%s3 + $0x290] sm:$0xff]
        %v1249 = vld [vmem:[%s3 + $0x298] sm:$0xff]
        %v1250 = vld [vmem:[%s3 + $0x2a0] sm:$0xff]
        %v1251 = vld [vmem:[%s3 + $0x2a8] sm:$0xff]
        %v1252 = vld [vmem:[%s3 + $0x2b0] sm:$0xff]
        %v1253 = vld [vmem:[%s3 + $0x2b8] sm:$0xff]
        %v1254 = vld [vmem:[%s3 + $0x2c0] sm:$0xff]
        %v1255 = vld [vmem:[%s3 + $0x2c8] sm:$0xff]
        %v1256 = vld [vmem:[%s3 + $0x2d0] sm:$0xff]
        %v1257 = vld [vmem:[%s3 + $0x2d8] sm:$0xff]
        %v1258 = vld [vmem:[%s3 + $0x2e0] sm:$0xff]
        %v1259 = vld [vmem:[%s3 + $0x2e8] sm:$0xff]
        %v1260 = vld [vmem:[%s3 + $0x2f0] sm:$0xff]
        %v1261 = vld [vmem:[%s3 + $0x2f8] sm:$0xff]
        %v1262 = vld [vmem:[%s3 + $0x300] sm:$0xff]
        %v1263 = vld [vmem:[%s3 + $0x308] sm:$0xff]
        %v1264 = vld [vmem:[%s3 + $0x310] sm:$0xff]
        %v1265 = vld [vmem:[%s3 + $0x318] sm:$0xff]
        %v1266 = vld [vmem:[%s3 + $0x320] sm:$0xff]
        %v1267 = vld [vmem:[%s3 + $0x328] sm:$0xff]
        %v1268 = vld [vmem:[%s3 + $0x330] sm:$0xff]
        %v1269 = vld [vmem:[%s3 + $0x338] sm:$0xff]
        %v1270 = vld [vmem:[%s3 + $0x340] sm:$0xff]
        %v1271 = vld [vmem:[%s3 + $0x348] sm:$0xff]
        %v1272 = vld [vmem:[%s3 + $0x350] sm:$0xff]
        %v1273 = vld [vmem:[%s3 + $0x358] sm:$0xff]
        %v1274 = vld [vmem:[%s3 + $0x360] sm:$0xff]
        %v1275 = vld [vmem:[%s3 + $0x368] sm:$0xff]
        %v1276 = vld [vmem:[%s3 + $0x370] sm:$0xff]
        %v1277 = vld [vmem:[%s3 + $0x378] sm:$0xff]
        %v1278 = vld [vmem:[%s3 + $0x380] sm:$0xff]
        %v1279 = vld [vmem:[%s3 + $0x388] sm:$0xff]
        %v1280 = vld [vmem:[%s3 + $0x390] sm:$0xff]
        %v1281 = vld [vmem:[%s3 + $0x398] sm:$0xff]
        %v1282 = vld [vmem:[%s3 + $0x3a0] sm:$0xff]
        %v1283 = vld [vmem:[%s3 + $0x3a8] sm:$0xff]
        %v1284 = vld [vmem:[%s3 + $0x3b0] sm:$0xff]
        %v1285 = vld [vmem:[%s3 + $0x3b8] sm:$0xff]
        %v1286 = vld [vmem:[%s3 + $0x3c0] sm:$0xff]
        %v1287 = vld [vmem:[%s3 + $0x3c8] sm:$0xff]
        %v1288 = vld [vmem:[%s3 + $0x3d0] sm:$0xff]
        %v1289 = vld [vmem:[%s3 + $0x3d8] sm:$0xff]
        %v1290 = vld [vmem:[%s3 + $0x3e0] sm:$0xff]
        %v1291 = vld [vmem:[%s3 + $0x3e8] sm:$0xff]
        %v1292 = vld [vmem:[%s3 + $0x3f0] sm:$0xff]
        %v1293 = vld [vmem:[%s3 + $0x3f8] sm:$0xff]
        %v1294 = vld [vmem:[%s4] sm:$0xf]
        %v1296 = vperm.slane %v1294, 0
        %v1297 = vperm.slane %v1294, 1
        %v1298 = vperm.slane %v1294, 2
        %v1299 = vperm.slane %v1294, 3
        %v1432 = vunpack.c.l.b16 %v1166
        %v1433 = vunpack.c.h.b16 %v1166
        %v1434 = vunpack.c.l.b16 %v1167
        %v1435 = vunpack.c.h.b16 %v1167
        %v1436 = vunpack.c.l.b16 %v1168
        %v1437 = vunpack.c.h.b16 %v1168
        %v1438 = vunpack.c.l.b16 %v1169
        %v1439 = vunpack.c.h.b16 %v1169
        %v1440 = vunpack.c.l.b16 %v1170
        %v1441 = vunpack.c.h.b16 %v1170
        %v1442 = vunpack.c.l.b16 %v1171
        %v1443 = vunpack.c.h.b16 %v1171
        %v1444 = vunpack.c.l.b16 %v1172
        %v1445 = vunpack.c.h.b16 %v1172
        %v1446 = vunpack.c.l.b16 %v1173
        %v1447 = vunpack.c.h.b16 %v1173
        %v1448 = vunpack.c.l.b16 %v1174
        %v1449 = vunpack.c.h.b16 %v1174
        %v1450 = vunpack.c.l.b16 %v1175
        %v1451 = vunpack.c.h.b16 %v1175
        %v1452 = vunpack.c.l.b16 %v1176
        %v1453 = vunpack.c.h.b16 %v1176
        %v1454 = vunpack.c.l.b16 %v1177
        %v1455 = vunpack.c.h.b16 %v1177
        %v1456 = vunpack.c.l.b16 %v1178
        %v1457 = vunpack.c.h.b16 %v1178
        %v1458 = vunpack.c.l.b16 %v1179
        %v1459 = vunpack.c.h.b16 %v1179
        %v1460 = vunpack.c.l.b16 %v1180
        %v1461 = vunpack.c.h.b16 %v1180
        %v1462 = vunpack.c.l.b16 %v1181
        %v1463 = vunpack.c.h.b16 %v1181
        %v1464 = vunpack.c.l.b16 %v1182
        %v1465 = vunpack.c.h.b16 %v1182
        %v1466 = vunpack.c.l.b16 %v1183
        %v1467 = vunpack.c.h.b16 %v1183
        %v1468 = vunpack.c.l.b16 %v1184
        %v1469 = vunpack.c.h.b16 %v1184
        %v1470 = vunpack.c.l.b16 %v1185
        %v1471 = vunpack.c.h.b16 %v1185
        %v1472 = vunpack.c.l.b16 %v1186
        %v1473 = vunpack.c.h.b16 %v1186
        %v1474 = vunpack.c.l.b16 %v1187
        %v1475 = vunpack.c.h.b16 %v1187
        %v1476 = vunpack.c.l.b16 %v1188
        %v1477 = vunpack.c.h.b16 %v1188
        %v1478 = vunpack.c.l.b16 %v1189
        %v1479 = vunpack.c.h.b16 %v1189
        %v1480 = vunpack.c.l.b16 %v1190
        %v1481 = vunpack.c.h.b16 %v1190
        %v1482 = vunpack.c.l.b16 %v1191
        %v1483 = vunpack.c.h.b16 %v1191
        %v1484 = vunpack.c.l.b16 %v1192
        %v1485 = vunpack.c.h.b16 %v1192
        %v1486 = vunpack.c.l.b16 %v1193
        %v1487 = vunpack.c.h.b16 %v1193
        %v1488 = vunpack.c.l.b16 %v1194
        %v1489 = vunpack.c.h.b16 %v1194
        %v1490 = vunpack.c.l.b16 %v1195
        %v1491 = vunpack.c.h.b16 %v1195
        %v1492 = vunpack.c.l.b16 %v1196
        %v1493 = vunpack.c.h.b16 %v1196
        %v1494 = vunpack.c.l.b16 %v1197
        %v1495 = vunpack.c.h.b16 %v1197
        %v1496 = vunpack.c.l.b16 %v1198
        %v1497 = vunpack.c.h.b16 %v1198
        %v1498 = vunpack.c.l.b16 %v1199
        %v1499 = vunpack.c.h.b16 %v1199
        %v1500 = vunpack.c.l.b16 %v1200
        %v1501 = vunpack.c.h.b16 %v1200
        %v1502 = vunpack.c.l.b16 %v1201
        %v1503 = vunpack.c.h.b16 %v1201
        %v1504 = vunpack.c.l.b16 %v1202
        %v1505 = vunpack.c.h.b16 %v1202
        %v1506 = vunpack.c.l.b16 %v1203
        %v1507 = vunpack.c.h.b16 %v1203
        %v1508 = vunpack.c.l.b16 %v1204
        %v1509 = vunpack.c.h.b16 %v1204
        %v1510 = vunpack.c.l.b16 %v1205
        %v1511 = vunpack.c.h.b16 %v1205
        %v1512 = vunpack.c.l.b16 %v1206
        %v1513 = vunpack.c.h.b16 %v1206
        %v1514 = vunpack.c.l.b16 %v1207
        %v1515 = vunpack.c.h.b16 %v1207
        %v1516 = vunpack.c.l.b16 %v1208
        %v1517 = vunpack.c.h.b16 %v1208
        %v1518 = vunpack.c.l.b16 %v1209
        %v1519 = vunpack.c.h.b16 %v1209
        %v1520 = vunpack.c.l.b16 %v1210
        %v1521 = vunpack.c.h.b16 %v1210
        %v1522 = vunpack.c.l.b16 %v1211
        %v1523 = vunpack.c.h.b16 %v1211
        %v1524 = vunpack.c.l.b16 %v1212
        %v1525 = vunpack.c.h.b16 %v1212
        %v1526 = vunpack.c.l.b16 %v1213
        %v1527 = vunpack.c.h.b16 %v1213
        %v1528 = vunpack.c.l.b16 %v1214
        %v1529 = vunpack.c.h.b16 %v1214
        %v1530 = vunpack.c.l.b16 %v1215
        %v1531 = vunpack.c.h.b16 %v1215
        %v1532 = vunpack.c.l.b16 %v1216
        %v1533 = vunpack.c.h.b16 %v1216
        %v1534 = vunpack.c.l.b16 %v1217
        %v1535 = vunpack.c.h.b16 %v1217
        %v1536 = vunpack.c.l.b16 %v1218
        %v1537 = vunpack.c.h.b16 %v1218
        %v1538 = vunpack.c.l.b16 %v1219
        %v1539 = vunpack.c.h.b16 %v1219
        %v1540 = vunpack.c.l.b16 %v1220
        %v1541 = vunpack.c.h.b16 %v1220
        %v1542 = vunpack.c.l.b16 %v1221
        %v1543 = vunpack.c.h.b16 %v1221
        %v1544 = vunpack.c.l.b16 %v1222
        %v1545 = vunpack.c.h.b16 %v1222
        %v1546 = vunpack.c.l.b16 %v1223
        %v1547 = vunpack.c.h.b16 %v1223
        %v1548 = vunpack.c.l.b16 %v1224
        %v1549 = vunpack.c.h.b16 %v1224
        %v1550 = vunpack.c.l.b16 %v1225
        %v1551 = vunpack.c.h.b16 %v1225
        %v1552 = vunpack.c.l.b16 %v1226
        %v1553 = vunpack.c.h.b16 %v1226
        %v1554 = vunpack.c.l.b16 %v1227
        %v1555 = vunpack.c.h.b16 %v1227
        %v1556 = vunpack.c.l.b16 %v1228
        %v1557 = vunpack.c.h.b16 %v1228
        %v1558 = vunpack.c.l.b16 %v1229
        %v1559 = vunpack.c.h.b16 %v1229
        %v1560 = vunpack.c.l.b16 %v1230
        %v1561 = vunpack.c.h.b16 %v1230
        %v1562 = vunpack.c.l.b16 %v1231
        %v1563 = vunpack.c.h.b16 %v1231
        %v1564 = vunpack.c.l.b16 %v1232
        %v1565 = vunpack.c.h.b16 %v1232
        %v1566 = vunpack.c.l.b16 %v1233
        %v1567 = vunpack.c.h.b16 %v1233
        %v1568 = vunpack.c.l.b16 %v1234
        %v1569 = vunpack.c.h.b16 %v1234
        %v1570 = vunpack.c.l.b16 %v1235
        %v1571 = vunpack.c.h.b16 %v1235
        %v1572 = vunpack.c.l.b16 %v1236
        %v1573 = vunpack.c.h.b16 %v1236
        %v1574 = vunpack.c.l.b16 %v1237
        %v1575 = vunpack.c.h.b16 %v1237
        %v1576 = vunpack.c.l.b16 %v1238
        %v1577 = vunpack.c.h.b16 %v1238
        %v1578 = vunpack.c.l.b16 %v1239
        %v1579 = vunpack.c.h.b16 %v1239
        %v1580 = vunpack.c.l.b16 %v1240
        %v1581 = vunpack.c.h.b16 %v1240
        %v1582 = vunpack.c.l.b16 %v1241
        %v1583 = vunpack.c.h.b16 %v1241
        %v1584 = vunpack.c.l.b16 %v1242
        %v1585 = vunpack.c.h.b16 %v1242
        %v1586 = vunpack.c.l.b16 %v1243
        %v1587 = vunpack.c.h.b16 %v1243
        %v1588 = vunpack.c.l.b16 %v1244
        %v1589 = vunpack.c.h.b16 %v1244
        %v1590 = vunpack.c.l.b16 %v1245
        %v1591 = vunpack.c.h.b16 %v1245
        %v1592 = vunpack.c.l.b16 %v1246
        %v1593 = vunpack.c.h.b16 %v1246
        %v1594 = vunpack.c.l.b16 %v1247
        %v1595 = vunpack.c.h.b16 %v1247
        %v1596 = vunpack.c.l.b16 %v1248
        %v1597 = vunpack.c.h.b16 %v1248
        %v1598 = vunpack.c.l.b16 %v1249
        %v1599 = vunpack.c.h.b16 %v1249
        %v1600 = vunpack.c.l.b16 %v1250
        %v1601 = vunpack.c.h.b16 %v1250
        %v1602 = vunpack.c.l.b16 %v1251
        %v1603 = vunpack.c.h.b16 %v1251
        %v1604 = vunpack.c.l.b16 %v1252
        %v1605 = vunpack.c.h.b16 %v1252
        %v1606 = vunpack.c.l.b16 %v1253
        %v1607 = vunpack.c.h.b16 %v1253
        %v1608 = vunpack.c.l.b16 %v1254
        %v1609 = vunpack.c.h.b16 %v1254
        %v1610 = vunpack.c.l.b16 %v1255
        %v1611 = vunpack.c.h.b16 %v1255
        %v1612 = vunpack.c.l.b16 %v1256
        %v1613 = vunpack.c.h.b16 %v1256
        %v1614 = vunpack.c.l.b16 %v1257
        %v1615 = vunpack.c.h.b16 %v1257
        %v1616 = vunpack.c.l.b16 %v1258
        %v1617 = vunpack.c.h.b16 %v1258
        %v1618 = vunpack.c.l.b16 %v1259
        %v1619 = vunpack.c.h.b16 %v1259
        %v1620 = vunpack.c.l.b16 %v1260
        %v1621 = vunpack.c.h.b16 %v1260
        %v1622 = vunpack.c.l.b16 %v1261
        %v1623 = vunpack.c.h.b16 %v1261
        %v1624 = vunpack.c.l.b16 %v1262
        %v1625 = vunpack.c.h.b16 %v1262
        %v1626 = vunpack.c.l.b16 %v1263
        %v1627 = vunpack.c.h.b16 %v1263
        %v1628 = vunpack.c.l.b16 %v1264
        %v1629 = vunpack.c.h.b16 %v1264
        %v1630 = vunpack.c.l.b16 %v1265
        %v1631 = vunpack.c.h.b16 %v1265
        %v1632 = vunpack.c.l.b16 %v1266
        %v1633 = vunpack.c.h.b16 %v1266
        %v1634 = vunpack.c.l.b16 %v1267
        %v1635 = vunpack.c.h.b16 %v1267
        %v1636 = vunpack.c.l.b16 %v1268
        %v1637 = vunpack.c.h.b16 %v1268
        %v1638 = vunpack.c.l.b16 %v1269
        %v1639 = vunpack.c.h.b16 %v1269
        %v1640 = vunpack.c.l.b16 %v1270
        %v1641 = vunpack.c.h.b16 %v1270
        %v1642 = vunpack.c.l.b16 %v1271
        %v1643 = vunpack.c.h.b16 %v1271
        %v1644 = vunpack.c.l.b16 %v1272
        %v1645 = vunpack.c.h.b16 %v1272
        %v1646 = vunpack.c.l.b16 %v1273
        %v1647 = vunpack.c.h.b16 %v1273
        %v1648 = vunpack.c.l.b16 %v1274
        %v1649 = vunpack.c.h.b16 %v1274
        %v1650 = vunpack.c.l.b16 %v1275
        %v1651 = vunpack.c.h.b16 %v1275
        %v1652 = vunpack.c.l.b16 %v1276
        %v1653 = vunpack.c.h.b16 %v1276
        %v1654 = vunpack.c.l.b16 %v1277
        %v1655 = vunpack.c.h.b16 %v1277
        %v1656 = vunpack.c.l.b16 %v1278
        %v1657 = vunpack.c.h.b16 %v1278
        %v1658 = vunpack.c.l.b16 %v1279
        %v1659 = vunpack.c.h.b16 %v1279
        %v1660 = vunpack.c.l.b16 %v1280
        %v1661 = vunpack.c.h.b16 %v1280
        %v1662 = vunpack.c.l.b16 %v1281
        %v1663 = vunpack.c.h.b16 %v1281
        %v1664 = vunpack.c.l.b16 %v1282
        %v1665 = vunpack.c.h.b16 %v1282
        %v1666 = vunpack.c.l.b16 %v1283
        %v1667 = vunpack.c.h.b16 %v1283
        %v1668 = vunpack.c.l.b16 %v1284
        %v1669 = vunpack.c.h.b16 %v1284
        %v1670 = vunpack.c.l.b16 %v1285
        %v1671 = vunpack.c.h.b16 %v1285
        %v1672 = vunpack.c.l.b16 %v1286
        %v1673 = vunpack.c.h.b16 %v1286
        %v1674 = vunpack.c.l.b16 %v1287
        %v1675 = vunpack.c.h.b16 %v1287
        %v1676 = vunpack.c.l.b16 %v1288
        %v1677 = vunpack.c.h.b16 %v1288
        %v1678 = vunpack.c.l.b16 %v1289
        %v1679 = vunpack.c.h.b16 %v1289
        %v1680 = vunpack.c.l.b16 %v1290
        %v1681 = vunpack.c.h.b16 %v1290
        %v1682 = vunpack.c.l.b16 %v1291
        %v1683 = vunpack.c.h.b16 %v1291
        %v1684 = vunpack.c.l.b16 %v1292
        %v1685 = vunpack.c.h.b16 %v1292
        %v1686 = vunpack.c.l.b16 %v1293
        %v1687 = vunpack.c.h.b16 %v1293
        %v1688 = vpack.c.b16 %v1436, %v1432
        %v1689 = vpack.c.b16 %v1437, %v1433
        %v1690 = vpack.c.b16 %v1438, %v1434
        %v1691 = vpack.c.b16 %v1439, %v1435
        %v1692 = vpack.c.b16 %v1444, %v1440
        %v1693 = vpack.c.b16 %v1445, %v1441
        %v1694 = vpack.c.b16 %v1446, %v1442
        %v1695 = vpack.c.b16 %v1447, %v1443
        %v1696 = vpack.c.b16 %v1452, %v1448
        %v1697 = vpack.c.b16 %v1453, %v1449
        %v1698 = vpack.c.b16 %v1454, %v1450
        %v1699 = vpack.c.b16 %v1455, %v1451
        %v1700 = vpack.c.b16 %v1460, %v1456
        %v1701 = vpack.c.b16 %v1461, %v1457
        %v1702 = vpack.c.b16 %v1462, %v1458
        %v1703 = vpack.c.b16 %v1463, %v1459
        %v1704 = vpack.c.b16 %v1468, %v1464
        %v1705 = vpack.c.b16 %v1469, %v1465
        %v1706 = vpack.c.b16 %v1470, %v1466
        %v1707 = vpack.c.b16 %v1471, %v1467
        %v1708 = vpack.c.b16 %v1476, %v1472
        %v1709 = vpack.c.b16 %v1477, %v1473
        %v1710 = vpack.c.b16 %v1478, %v1474
        %v1711 = vpack.c.b16 %v1479, %v1475
        %v1712 = vpack.c.b16 %v1484, %v1480
        %v1713 = vpack.c.b16 %v1485, %v1481
        %v1714 = vpack.c.b16 %v1486, %v1482
        %v1715 = vpack.c.b16 %v1487, %v1483
        %v1716 = vpack.c.b16 %v1492, %v1488
        %v1717 = vpack.c.b16 %v1493, %v1489
        %v1718 = vpack.c.b16 %v1494, %v1490
        %v1719 = vpack.c.b16 %v1495, %v1491
        %v1720 = vpack.c.b16 %v1500, %v1496
        %v1721 = vpack.c.b16 %v1501, %v1497
        %v1722 = vpack.c.b16 %v1502, %v1498
        %v1723 = vpack.c.b16 %v1503, %v1499
        %v1724 = vpack.c.b16 %v1508, %v1504
        %v1725 = vpack.c.b16 %v1509, %v1505
        %v1726 = vpack.c.b16 %v1510, %v1506
        %v1727 = vpack.c.b16 %v1511, %v1507
        %v1728 = vpack.c.b16 %v1516, %v1512
        %v1729 = vpack.c.b16 %v1517, %v1513
        %v1730 = vpack.c.b16 %v1518, %v1514
        %v1731 = vpack.c.b16 %v1519, %v1515
        %v1732 = vpack.c.b16 %v1524, %v1520
        %v1733 = vpack.c.b16 %v1525, %v1521
        %v1734 = vpack.c.b16 %v1526, %v1522
        %v1735 = vpack.c.b16 %v1527, %v1523
        %v1736 = vpack.c.b16 %v1532, %v1528
        %v1737 = vpack.c.b16 %v1533, %v1529
        %v1738 = vpack.c.b16 %v1534, %v1530
        %v1739 = vpack.c.b16 %v1535, %v1531
        %v1740 = vpack.c.b16 %v1540, %v1536
        %v1741 = vpack.c.b16 %v1541, %v1537
        %v1742 = vpack.c.b16 %v1542, %v1538
        %v1743 = vpack.c.b16 %v1543, %v1539
        %v1744 = vpack.c.b16 %v1548, %v1544
        %v1745 = vpack.c.b16 %v1549, %v1545
        %v1746 = vpack.c.b16 %v1550, %v1546
        %v1747 = vpack.c.b16 %v1551, %v1547
        %v1748 = vpack.c.b16 %v1556, %v1552
        %v1749 = vpack.c.b16 %v1557, %v1553
        %v1750 = vpack.c.b16 %v1558, %v1554
        %v1751 = vpack.c.b16 %v1559, %v1555
        %v1752 = vpack.c.b16 %v1564, %v1560
        %v1753 = vpack.c.b16 %v1565, %v1561
        %v1754 = vpack.c.b16 %v1566, %v1562
        %v1755 = vpack.c.b16 %v1567, %v1563
        %v1756 = vpack.c.b16 %v1572, %v1568
        %v1757 = vpack.c.b16 %v1573, %v1569
        %v1758 = vpack.c.b16 %v1574, %v1570
        %v1759 = vpack.c.b16 %v1575, %v1571
        %v1760 = vpack.c.b16 %v1580, %v1576
        %v1761 = vpack.c.b16 %v1581, %v1577
        %v1762 = vpack.c.b16 %v1582, %v1578
        %v1763 = vpack.c.b16 %v1583, %v1579
        %v1764 = vpack.c.b16 %v1588, %v1584
        %v1765 = vpack.c.b16 %v1589, %v1585
        %v1766 = vpack.c.b16 %v1590, %v1586
        %v1767 = vpack.c.b16 %v1591, %v1587
        %v1768 = vpack.c.b16 %v1596, %v1592
        %v1769 = vpack.c.b16 %v1597, %v1593
        %v1770 = vpack.c.b16 %v1598, %v1594
        %v1771 = vpack.c.b16 %v1599, %v1595
        %v1772 = vpack.c.b16 %v1604, %v1600
        %v1773 = vpack.c.b16 %v1605, %v1601
        %v1774 = vpack.c.b16 %v1606, %v1602
        %v1775 = vpack.c.b16 %v1607, %v1603
        %v1776 = vpack.c.b16 %v1612, %v1608
        %v1777 = vpack.c.b16 %v1613, %v1609
        %v1778 = vpack.c.b16 %v1614, %v1610
        %v1779 = vpack.c.b16 %v1615, %v1611
        %v1780 = vpack.c.b16 %v1620, %v1616
        %v1781 = vpack.c.b16 %v1621, %v1617
        %v1782 = vpack.c.b16 %v1622, %v1618
        %v1783 = vpack.c.b16 %v1623, %v1619
        %v1784 = vpack.c.b16 %v1628, %v1624
        %v1785 = vpack.c.b16 %v1629, %v1625
        %v1786 = vpack.c.b16 %v1630, %v1626
        %v1787 = vpack.c.b16 %v1631, %v1627
        %v1788 = vpack.c.b16 %v1636, %v1632
        %v1789 = vpack.c.b16 %v1637, %v1633
        %v1790 = vpack.c.b16 %v1638, %v1634
        %v1791 = vpack.c.b16 %v1639, %v1635
        %v1792 = vpack.c.b16 %v1644, %v1640
        %v1793 = vpack.c.b16 %v1645, %v1641
        %v1794 = vpack.c.b16 %v1646, %v1642
        %v1795 = vpack.c.b16 %v1647, %v1643
        %v1796 = vpack.c.b16 %v1652, %v1648
        %v1797 = vpack.c.b16 %v1653, %v1649
        %v1798 = vpack.c.b16 %v1654, %v1650
        %v1799 = vpack.c.b16 %v1655, %v1651
        %v1800 = vpack.c.b16 %v1660, %v1656
        %v1801 = vpack.c.b16 %v1661, %v1657
        %v1802 = vpack.c.b16 %v1662, %v1658
        %v1803 = vpack.c.b16 %v1663, %v1659
        %v1804 = vpack.c.b16 %v1668, %v1664
        %v1805 = vpack.c.b16 %v1669, %v1665
        %v1806 = vpack.c.b16 %v1670, %v1666
        %v1807 = vpack.c.b16 %v1671, %v1667
        %v1808 = vpack.c.b16 %v1676, %v1672
        %v1809 = vpack.c.b16 %v1677, %v1673
        %v1810 = vpack.c.b16 %v1678, %v1674
        %v1811 = vpack.c.b16 %v1679, %v1675
        %v1812 = vpack.c.b16 %v1684, %v1680
        %v1813 = vpack.c.b16 %v1685, %v1681
        %v1814 = vpack.c.b16 %v1686, %v1682
        %v1815 = vpack.c.b16 %v1687, %v1683
        %1944 = vmatpush.bf16.msra.mxu0 %v1716
        %1945 = vmatpush.bf16.msra.mxu0 %v1712
        %1946 = vmatpush.bf16.msra.mxu0 %v1708
        %1947 = vmatpush.bf16.msra.mxu0 %v1704
        %1948 = vmatpush.bf16.msra.mxu0 %v1700
        %1949 = vmatpush.bf16.msra.mxu0 %v1696
        %1950 = vmatpush.bf16.msra.mxu0 %v1692
        %1951 = vmatpush.bf16.msra.mxu0 %v1688
        %1952 = vmatmul.bf16.gmra.mxu0 %v1150
        %v1953 = vpop.f32.mrf.mxu0
        %v1954 = vadd.f32 %v1296, %v1953
        %v1955 = vpop.f32.mrf.mxu0
        %v1956 = vadd.f32 %v1296, %v1955
        %1957 = vmatmul.bf16.gmra.mxu0 %v1154
        %v1958 = vpop.f32.mrf.mxu0
        %v1959 = vadd.f32 %v1296, %v1958
        %v1960 = vpop.f32.mrf.mxu0
        %v1961 = vadd.f32 %v1296, %v1960
        %1962 = vmatmul.bf16.gmra.mxu0 %v1158
        %v1963 = vpop.f32.mrf.mxu0
        %v1964 = vadd.f32 %v1296, %v1963
        %v1965 = vpop.f32.mrf.mxu0
        %v1966 = vadd.f32 %v1296, %v1965
        %1967 = vmatmul.bf16.gmra.mxu0 %v1162
        %v1968 = vpop.f32.mrf.mxu0
        %v1969 = vadd.f32 %v1296, %v1968
        %v1970 = vpop.f32.mrf.mxu0
        %v1971 = vadd.f32 %v1296, %v1970
        %1972 = vdwg.mxu0
        %1973 = vmatpush.bf16.msra.mxu0 %v1748
        %1974 = vmatpush.bf16.msra.mxu0 %v1744
        %1975 = vmatpush.bf16.msra.mxu0 %v1740
        %1976 = vmatpush.bf16.msra.mxu0 %v1736
        %1977 = vmatpush.bf16.msra.mxu0 %v1732
        %1978 = vmatpush.bf16.msra.mxu0 %v1728
        %1979 = vmatpush.bf16.msra.mxu0 %v1724
        %1980 = vmatpush.bf16.msra.mxu0 %v1720
        %1981 = vmatmul.bf16.gmra.mxu0 %v1151
        %v1982 = vpop.f32.mrf.mxu0
        %v1983 = vadd.f32 %v1954, %v1982
        %v1984 = vpop.f32.mrf.mxu0
        %v1985 = vadd.f32 %v1956, %v1984
        %1986 = vmatmul.bf16.gmra.mxu0 %v1155
        %v1987 = vpop.f32.mrf.mxu0
        %v1988 = vadd.f32 %v1959, %v1987
        %v1989 = vpop.f32.mrf.mxu0
        %v1990 = vadd.f32 %v1961, %v1989
        %1991 = vmatmul.bf16.gmra.mxu0 %v1159
        %v1992 = vpop.f32.mrf.mxu0
        %v1993 = vadd.f32 %v1964, %v1992
        %v1994 = vpop.f32.mrf.mxu0
        %v1995 = vadd.f32 %v1966, %v1994
        %1996 = vmatmul.bf16.gmra.mxu0 %v1163
        %v1997 = vpop.f32.mrf.mxu0
        %v1998 = vadd.f32 %v1969, %v1997
        %v1999 = vpop.f32.mrf.mxu0
        %v2000 = vadd.f32 %v1971, %v1999
        %2001 = vdwg.mxu0
        %2002 = vmatpush.bf16.msra.mxu0 %v1780
        %2003 = vmatpush.bf16.msra.mxu0 %v1776
        %2004 = vmatpush.bf16.msra.mxu0 %v1772
        %2005 = vmatpush.bf16.msra.mxu0 %v1768
        %2006 = vmatpush.bf16.msra.mxu0 %v1764
        %2007 = vmatpush.bf16.msra.mxu0 %v1760
        %2008 = vmatpush.bf16.msra.mxu0 %v1756
        %2009 = vmatpush.bf16.msra.mxu0 %v1752
        %2010 = vmatmul.bf16.gmra.mxu0 %v1152
        %v2011 = vpop.f32.mrf.mxu0
        %v2012 = vadd.f32 %v1983, %v2011
        %v2013 = vpop.f32.mrf.mxu0
        %v2014 = vadd.f32 %v1985, %v2013
        %2015 = vmatmul.bf16.gmra.mxu0 %v1156
        %v2016 = vpop.f32.mrf.mxu0
        %v2017 = vadd.f32 %v1988, %v2016
        %v2018 = vpop.f32.mrf.mxu0
        %v2019 = vadd.f32 %v1990, %v2018
        %2020 = vmatmul.bf16.gmra.mxu0 %v1160
        %v2021 = vpop.f32.mrf.mxu0
        %v2022 = vadd.f32 %v1993, %v2021
        %v2023 = vpop.f32.mrf.mxu0
        %v2024 = vadd.f32 %v1995, %v2023
        %2025 = vmatmul.bf16.gmra.mxu0 %v1164
        %v2026 = vpop.f32.mrf.mxu0
        %v2027 = vadd.f32 %v1998, %v2026
        %v2028 = vpop.f32.mrf.mxu0
        %v2029 = vadd.f32 %v2000, %v2028
        %2030 = vdwg.mxu0
        %2031 = vmatpush.bf16.msra.mxu0 %v1812
        %2032 = vmatpush.bf16.msra.mxu0 %v1808
        %2033 = vmatpush.bf16.msra.mxu0 %v1804
        %2034 = vmatpush.bf16.msra.mxu0 %v1800
        %2035 = vmatpush.bf16.msra.mxu0 %v1796
        %2036 = vmatpush.bf16.msra.mxu0 %v1792
        %2037 = vmatpush.bf16.msra.mxu0 %v1788
        %2038 = vmatpush.bf16.msra.mxu0 %v1784
        %2039 = vmatmul.bf16.gmra.mxu0 %v1153
        %v2040 = vpop.f32.mrf.mxu0
        %v2041 = vadd.f32 %v2012, %v2040
        %v2042 = vpop.f32.mrf.mxu0
        %v2043 = vadd.f32 %v2014, %v2042
        %2044 = vmatmul.bf16.gmra.mxu0 %v1157
        %v2045 = vpop.f32.mrf.mxu0
        %v2046 = vadd.f32 %v2017, %v2045
        %v2047 = vpop.f32.mrf.mxu0
        %v2048 = vadd.f32 %v2019, %v2047
        %2049 = vmatmul.bf16.gmra.mxu0 %v1161
        %v2050 = vpop.f32.mrf.mxu0
        %v2051 = vadd.f32 %v2022, %v2050
        %v2052 = vpop.f32.mrf.mxu0
        %v2053 = vadd.f32 %v2024, %v2052
        %2054 = vmatmul.bf16.gmra.mxu0 %v1165
        %v2055 = vpop.f32.mrf.mxu0
        %v2056 = vadd.f32 %v2027, %v2055
        %v2057 = vpop.f32.mrf.mxu0
        %v2058 = vadd.f32 %v2029, %v2057
        %2059 = vdwg.mxu0
        %2060 = vmatpush.bf16.msra.mxu0 %v1717
        %2061 = vmatpush.bf16.msra.mxu0 %v1713
        %2062 = vmatpush.bf16.msra.mxu0 %v1709
        %2063 = vmatpush.bf16.msra.mxu0 %v1705
        %2064 = vmatpush.bf16.msra.mxu0 %v1701
        %2065 = vmatpush.bf16.msra.mxu0 %v1697
        %2066 = vmatpush.bf16.msra.mxu0 %v1693
        %2067 = vmatpush.bf16.msra.mxu0 %v1689
        %2068 = vmatmul.bf16.gmra.mxu0 %v1150
        %v2069 = vpop.f32.mrf.mxu0
        %v2070 = vadd.f32 %v1297, %v2069
        %v2071 = vpop.f32.mrf.mxu0
        %v2072 = vadd.f32 %v1297, %v2071
        %2073 = vmatmul.bf16.gmra.mxu0 %v1154
        %v2074 = vpop.f32.mrf.mxu0
        %v2075 = vadd.f32 %v1297, %v2074
        %v2076 = vpop.f32.mrf.mxu0
        %v2077 = vadd.f32 %v1297, %v2076
        %2078 = vmatmul.bf16.gmra.mxu0 %v1158
        %v2079 = vpop.f32.mrf.mxu0
        %v2080 = vadd.f32 %v1297, %v2079
        %v2081 = vpop.f32.mrf.mxu0
        %v2082 = vadd.f32 %v1297, %v2081
        %2083 = vmatmul.bf16.gmra.mxu0 %v1162
        %v2084 = vpop.f32.mrf.mxu0
        %v2085 = vadd.f32 %v1297, %v2084
        %v2086 = vpop.f32.mrf.mxu0
        %v2087 = vadd.f32 %v1297, %v2086
        %2088 = vdwg.mxu0
        %2089 = vmatpush.bf16.msra.mxu0 %v1749
        %2090 = vmatpush.bf16.msra.mxu0 %v1745
        %2091 = vmatpush.bf16.msra.mxu0 %v1741
        %2092 = vmatpush.bf16.msra.mxu0 %v1737
        %2093 = vmatpush.bf16.msra.mxu0 %v1733
        %2094 = vmatpush.bf16.msra.mxu0 %v1729
        %2095 = vmatpush.bf16.msra.mxu0 %v1725
        %2096 = vmatpush.bf16.msra.mxu0 %v1721
        %2097 = vmatmul.bf16.gmra.mxu0 %v1151
        %v2098 = vpop.f32.mrf.mxu0
        %v2099 = vadd.f32 %v2070, %v2098
        %v2100 = vpop.f32.mrf.mxu0
        %v2101 = vadd.f32 %v2072, %v2100
        %2102 = vmatmul.bf16.gmra.mxu0 %v1155
        %v2103 = vpop.f32.mrf.mxu0
        %v2104 = vadd.f32 %v2075, %v2103
        %v2105 = vpop.f32.mrf.mxu0
        %v2106 = vadd.f32 %v2077, %v2105
        %2107 = vmatmul.bf16.gmra.mxu0 %v1159
        %v2108 = vpop.f32.mrf.mxu0
        %v2109 = vadd.f32 %v2080, %v2108
        %v2110 = vpop.f32.mrf.mxu0
        %v2111 = vadd.f32 %v2082, %v2110
        %2112 = vmatmul.bf16.gmra.mxu0 %v1163
        %v2113 = vpop.f32.mrf.mxu0
        %v2114 = vadd.f32 %v2085, %v2113
        %v2115 = vpop.f32.mrf.mxu0
        %v2116 = vadd.f32 %v2087, %v2115
        %2117 = vdwg.mxu0
        %2118 = vmatpush.bf16.msra.mxu0 %v1781
        %2119 = vmatpush.bf16.msra.mxu0 %v1777
        %2120 = vmatpush.bf16.msra.mxu0 %v1773
        %2121 = vmatpush.bf16.msra.mxu0 %v1769
        %2122 = vmatpush.bf16.msra.mxu0 %v1765
        %2123 = vmatpush.bf16.msra.mxu0 %v1761
        %2124 = vmatpush.bf16.msra.mxu0 %v1757
        %2125 = vmatpush.bf16.msra.mxu0 %v1753
        %2126 = vmatmul.bf16.gmra.mxu0 %v1152
        %v2127 = vpop.f32.mrf.mxu0
        %v2128 = vadd.f32 %v2099, %v2127
        %v2129 = vpop.f32.mrf.mxu0
        %v2130 = vadd.f32 %v2101, %v2129
        %2131 = vmatmul.bf16.gmra.mxu0 %v1156
        %v2132 = vpop.f32.mrf.mxu0
        %v2133 = vadd.f32 %v2104, %v2132
        %v2134 = vpop.f32.mrf.mxu0
        %v2135 = vadd.f32 %v2106, %v2134
        %2136 = vmatmul.bf16.gmra.mxu0 %v1160
        %v2137 = vpop.f32.mrf.mxu0
        %v2138 = vadd.f32 %v2109, %v2137
        %v2139 = vpop.f32.mrf.mxu0
        %v2140 = vadd.f32 %v2111, %v2139
        %2141 = vmatmul.bf16.gmra.mxu0 %v1164
        %v2142 = vpop.f32.mrf.mxu0
        %v2143 = vadd.f32 %v2114, %v2142
        %v2144 = vpop.f32.mrf.mxu0
        %v2145 = vadd.f32 %v2116, %v2144
        %2146 = vdwg.mxu0
        %2147 = vmatpush.bf16.msra.mxu0 %v1813
        %2148 = vmatpush.bf16.msra.mxu0 %v1809
        %2149 = vmatpush.bf16.msra.mxu0 %v1805
        %2150 = vmatpush.bf16.msra.mxu0 %v1801
        %2151 = vmatpush.bf16.msra.mxu0 %v1797
        %2152 = vmatpush.bf16.msra.mxu0 %v1793
        %2153 = vmatpush.bf16.msra.mxu0 %v1789
        %2154 = vmatpush.bf16.msra.mxu0 %v1785
        %2155 = vmatmul.bf16.gmra.mxu0 %v1153
        %v2156 = vpop.f32.mrf.mxu0
        %v2157 = vadd.f32 %v2128, %v2156
        %v2158 = vpop.f32.mrf.mxu0
        %v2159 = vadd.f32 %v2130, %v2158
        %2160 = vmatmul.bf16.gmra.mxu0 %v1157
        %v2161 = vpop.f32.mrf.mxu0
        %v2162 = vadd.f32 %v2133, %v2161
        %v2163 = vpop.f32.mrf.mxu0
        %v2164 = vadd.f32 %v2135, %v2163
        %2165 = vmatmul.bf16.gmra.mxu0 %v1161
        %v2166 = vpop.f32.mrf.mxu0
        %v2167 = vadd.f32 %v2138, %v2166
        %v2168 = vpop.f32.mrf.mxu0
        %v2169 = vadd.f32 %v2140, %v2168
        %2170 = vmatmul.bf16.gmra.mxu0 %v1165
        %v2171 = vpop.f32.mrf.mxu0
        %v2172 = vadd.f32 %v2143, %v2171
        %v2173 = vpop.f32.mrf.mxu0
        %v2174 = vadd.f32 %v2145, %v2173
        %2175 = vdwg.mxu0
        %2176 = vmatpush.bf16.msra.mxu0 %v1718
        %2177 = vmatpush.bf16.msra.mxu0 %v1714
        %2178 = vmatpush.bf16.msra.mxu0 %v1710
        %2179 = vmatpush.bf16.msra.mxu0 %v1706
        %2180 = vmatpush.bf16.msra.mxu0 %v1702
        %2181 = vmatpush.bf16.msra.mxu0 %v1698
        %2182 = vmatpush.bf16.msra.mxu0 %v1694
        %2183 = vmatpush.bf16.msra.mxu0 %v1690
        %2184 = vmatmul.bf16.gmra.mxu0 %v1150
        %v2185 = vpop.f32.mrf.mxu0
        %v2186 = vadd.f32 %v1298, %v2185
        %v2187 = vpop.f32.mrf.mxu0
        %v2188 = vadd.f32 %v1298, %v2187
        %2189 = vmatmul.bf16.gmra.mxu0 %v1154
        %v2190 = vpop.f32.mrf.mxu0
        %v2191 = vadd.f32 %v1298, %v2190
        %v2192 = vpop.f32.mrf.mxu0
        %v2193 = vadd.f32 %v1298, %v2192
        %2194 = vmatmul.bf16.gmra.mxu0 %v1158
        %v2195 = vpop.f32.mrf.mxu0
        %v2196 = vadd.f32 %v1298, %v2195
        %v2197 = vpop.f32.mrf.mxu0
        %v2198 = vadd.f32 %v1298, %v2197
        %2199 = vmatmul.bf16.gmra.mxu0 %v1162
        %v2200 = vpop.f32.mrf.mxu0
        %v2201 = vadd.f32 %v1298, %v2200
        %v2202 = vpop.f32.mrf.mxu0
        %v2203 = vadd.f32 %v1298, %v2202
        %2204 = vdwg.mxu0
        %2205 = vmatpush.bf16.msra.mxu0 %v1750
        %2206 = vmatpush.bf16.msra.mxu0 %v1746
        %2207 = vmatpush.bf16.msra.mxu0 %v1742
        %2208 = vmatpush.bf16.msra.mxu0 %v1738
        %2209 = vmatpush.bf16.msra.mxu0 %v1734
        %2210 = vmatpush.bf16.msra.mxu0 %v1730
        %2211 = vmatpush.bf16.msra.mxu0 %v1726
        %2212 = vmatpush.bf16.msra.mxu0 %v1722
        %2213 = vmatmul.bf16.gmra.mxu0 %v1151
        %v2214 = vpop.f32.mrf.mxu0
        %v2215 = vadd.f32 %v2186, %v2214
        %v2216 = vpop.f32.mrf.mxu0
        %v2217 = vadd.f32 %v2188, %v2216
        %2218 = vmatmul.bf16.gmra.mxu0 %v1155
        %v2219 = vpop.f32.mrf.mxu0
        %v2220 = vadd.f32 %v2191, %v2219
        %v2221 = vpop.f32.mrf.mxu0
        %v2222 = vadd.f32 %v2193, %v2221
        %2223 = vmatmul.bf16.gmra.mxu0 %v1159
        %v2224 = vpop.f32.mrf.mxu0
        %v2225 = vadd.f32 %v2196, %v2224
        %v2226 = vpop.f32.mrf.mxu0
        %v2227 = vadd.f32 %v2198, %v2226
        %2228 = vmatmul.bf16.gmra.mxu0 %v1163
        %v2229 = vpop.f32.mrf.mxu0
        %v2230 = vadd.f32 %v2201, %v2229
        %v2231 = vpop.f32.mrf.mxu0
        %v2232 = vadd.f32 %v2203, %v2231
        %2233 = vdwg.mxu0
        %2234 = vmatpush.bf16.msra.mxu0 %v1782
        %2235 = vmatpush.bf16.msra.mxu0 %v1778
        %2236 = vmatpush.bf16.msra.mxu0 %v1774
        %2237 = vmatpush.bf16.msra.mxu0 %v1770
        %2238 = vmatpush.bf16.msra.mxu0 %v1766
        %2239 = vmatpush.bf16.msra.mxu0 %v1762
        %2240 = vmatpush.bf16.msra.mxu0 %v1758
        %2241 = vmatpush.bf16.msra.mxu0 %v1754
        %2242 = vmatmul.bf16.gmra.mxu0 %v1152
        %v2243 = vpop.f32.mrf.mxu0
        %v2244 = vadd.f32 %v2215, %v2243
        %v2245 = vpop.f32.mrf.mxu0
        %v2246 = vadd.f32 %v2217, %v2245
        %2247 = vmatmul.bf16.gmra.mxu0 %v1156
        %v2248 = vpop.f32.mrf.mxu0
        %v2249 = vadd.f32 %v2220, %v2248
        %v2250 = vpop.f32.mrf.mxu0
        %v2251 = vadd.f32 %v2222, %v2250
        %2252 = vmatmul.bf16.gmra.mxu0 %v1160
        %v2253 = vpop.f32.mrf.mxu0
        %v2254 = vadd.f32 %v2225, %v2253
        %v2255 = vpop.f32.mrf.mxu0
        %v2256 = vadd.f32 %v2227, %v2255
        %2257 = vmatmul.bf16.gmra.mxu0 %v1164
        %v2258 = vpop.f32.mrf.mxu0
        %v2259 = vadd.f32 %v2230, %v2258
        %v2260 = vpop.f32.mrf.mxu0
        %v2261 = vadd.f32 %v2232, %v2260
        %2262 = vdwg.mxu0
        %2263 = vmatpush.bf16.msra.mxu0 %v1814
        %2264 = vmatpush.bf16.msra.mxu0 %v1810
        %2265 = vmatpush.bf16.msra.mxu0 %v1806
        %2266 = vmatpush.bf16.msra.mxu0 %v1802
        %2267 = vmatpush.bf16.msra.mxu0 %v1798
        %2268 = vmatpush.bf16.msra.mxu0 %v1794
        %2269 = vmatpush.bf16.msra.mxu0 %v1790
        %2270 = vmatpush.bf16.msra.mxu0 %v1786
        %2271 = vmatmul.bf16.gmra.mxu0 %v1153
        %v2272 = vpop.f32.mrf.mxu0
        %v2273 = vadd.f32 %v2244, %v2272
        %v2274 = vpop.f32.mrf.mxu0
        %v2275 = vadd.f32 %v2246, %v2274
        %2276 = vmatmul.bf16.gmra.mxu0 %v1157
        %v2277 = vpop.f32.mrf.mxu0
        %v2278 = vadd.f32 %v2249, %v2277
        %v2279 = vpop.f32.mrf.mxu0
        %v2280 = vadd.f32 %v2251, %v2279
        %2281 = vmatmul.bf16.gmra.mxu0 %v1161
        %v2282 = vpop.f32.mrf.mxu0
        %v2283 = vadd.f32 %v2254, %v2282
        %v2284 = vpop.f32.mrf.mxu0
        %v2285 = vadd.f32 %v2256, %v2284
        %2286 = vmatmul.bf16.gmra.mxu0 %v1165
        %v2287 = vpop.f32.mrf.mxu0
        %v2288 = vadd.f32 %v2259, %v2287
        %v2289 = vpop.f32.mrf.mxu0
        %v2290 = vadd.f32 %v2261, %v2289
        %2291 = vdwg.mxu0
        %2292 = vmatpush.bf16.msra.mxu0 %v1719
        %2293 = vmatpush.bf16.msra.mxu0 %v1715
        %2294 = vmatpush.bf16.msra.mxu0 %v1711
        %2295 = vmatpush.bf16.msra.mxu0 %v1707
        %2296 = vmatpush.bf16.msra.mxu0 %v1703
        %2297 = vmatpush.bf16.msra.mxu0 %v1699
        %2298 = vmatpush.bf16.msra.mxu0 %v1695
        %2299 = vmatpush.bf16.msra.mxu0 %v1691
        %2300 = vmatmul.bf16.gmra.mxu0 %v1150
        %v2301 = vpop.f32.mrf.mxu0
        %v2302 = vadd.f32 %v1299, %v2301
        %v2303 = vpop.f32.mrf.mxu0
        %v2304 = vadd.f32 %v1299, %v2303
        %2305 = vmatmul.bf16.gmra.mxu0 %v1154
        %v2306 = vpop.f32.mrf.mxu0
        %v2307 = vadd.f32 %v1299, %v2306
        %v2308 = vpop.f32.mrf.mxu0
        %v2309 = vadd.f32 %v1299, %v2308
        %2310 = vmatmul.bf16.gmra.mxu0 %v1158
        %v2311 = vpop.f32.mrf.mxu0
        %v2312 = vadd.f32 %v1299, %v2311
        %v2313 = vpop.f32.mrf.mxu0
        %v2314 = vadd.f32 %v1299, %v2313
        %2315 = vmatmul.bf16.gmra.mxu0 %v1162
        %v2316 = vpop.f32.mrf.mxu0
        %v2317 = vadd.f32 %v1299, %v2316
        %v2318 = vpop.f32.mrf.mxu0
        %v2319 = vadd.f32 %v1299, %v2318
        %2320 = vdwg.mxu0
        %2321 = vmatpush.bf16.msra.mxu0 %v1751
        %2322 = vmatpush.bf16.msra.mxu0 %v1747
        %2323 = vmatpush.bf16.msra.mxu0 %v1743
        %2324 = vmatpush.bf16.msra.mxu0 %v1739
        %2325 = vmatpush.bf16.msra.mxu0 %v1735
        %2326 = vmatpush.bf16.msra.mxu0 %v1731
        %2327 = vmatpush.bf16.msra.mxu0 %v1727
        %2328 = vmatpush.bf16.msra.mxu0 %v1723
        %2329 = vmatmul.bf16.gmra.mxu0 %v1151
        %v2330 = vpop.f32.mrf.mxu0
        %v2331 = vadd.f32 %v2302, %v2330
        %v2332 = vpop.f32.mrf.mxu0
        %v2333 = vadd.f32 %v2304, %v2332
        %2334 = vmatmul.bf16.gmra.mxu0 %v1155
        %v2335 = vpop.f32.mrf.mxu0
        %v2336 = vadd.f32 %v2307, %v2335
        %v2337 = vpop.f32.mrf.mxu0
        %v2338 = vadd.f32 %v2309, %v2337
        %2339 = vmatmul.bf16.gmra.mxu0 %v1159
        %v2340 = vpop.f32.mrf.mxu0
        %v2341 = vadd.f32 %v2312, %v2340
        %v2342 = vpop.f32.mrf.mxu0
        %v2343 = vadd.f32 %v2314, %v2342
        %2344 = vmatmul.bf16.gmra.mxu0 %v1163
        %v2345 = vpop.f32.mrf.mxu0
        %v2346 = vadd.f32 %v2317, %v2345
        %v2347 = vpop.f32.mrf.mxu0
        %v2348 = vadd.f32 %v2319, %v2347
        %2349 = vdwg.mxu0
        %2350 = vmatpush.bf16.msra.mxu0 %v1783
        %2351 = vmatpush.bf16.msra.mxu0 %v1779
        %2352 = vmatpush.bf16.msra.mxu0 %v1775
        %2353 = vmatpush.bf16.msra.mxu0 %v1771
        %2354 = vmatpush.bf16.msra.mxu0 %v1767
        %2355 = vmatpush.bf16.msra.mxu0 %v1763
        %2356 = vmatpush.bf16.msra.mxu0 %v1759
        %2357 = vmatpush.bf16.msra.mxu0 %v1755
        %2358 = vmatmul.bf16.gmra.mxu0 %v1152
        %v2359 = vpop.f32.mrf.mxu0
        %v2360 = vadd.f32 %v2331, %v2359
        %v2361 = vpop.f32.mrf.mxu0
        %v2362 = vadd.f32 %v2333, %v2361
        %2363 = vmatmul.bf16.gmra.mxu0 %v1156
        %v2364 = vpop.f32.mrf.mxu0
        %v2365 = vadd.f32 %v2336, %v2364
        %v2366 = vpop.f32.mrf.mxu0
        %v2367 = vadd.f32 %v2338, %v2366
        %2368 = vmatmul.bf16.gmra.mxu0 %v1160
        %v2369 = vpop.f32.mrf.mxu0
        %v2370 = vadd.f32 %v2341, %v2369
        %v2371 = vpop.f32.mrf.mxu0
        %v2372 = vadd.f32 %v2343, %v2371
        %2373 = vmatmul.bf16.gmra.mxu0 %v1164
        %v2374 = vpop.f32.mrf.mxu0
        %v2375 = vadd.f32 %v2346, %v2374
        %v2376 = vpop.f32.mrf.mxu0
        %v2377 = vadd.f32 %v2348, %v2376
        %2378 = vdwg.mxu0
        %2379 = vmatpush.bf16.msra.mxu0 %v1815
        %2380 = vmatpush.bf16.msra.mxu0 %v1811
        %2381 = vmatpush.bf16.msra.mxu0 %v1807
        %2382 = vmatpush.bf16.msra.mxu0 %v1803
        %2383 = vmatpush.bf16.msra.mxu0 %v1799
        %2384 = vmatpush.bf16.msra.mxu0 %v1795
        %2385 = vmatpush.bf16.msra.mxu0 %v1791
        %2386 = vmatpush.bf16.msra.mxu0 %v1787
        %2387 = vmatmul.bf16.gmra.mxu0 %v1153
        %v2388 = vpop.f32.mrf.mxu0
        %v2389 = vadd.f32 %v2360, %v2388
        %v2390 = vpop.f32.mrf.mxu0
        %v2391 = vadd.f32 %v2362, %v2390
        %2392 = vmatmul.bf16.gmra.mxu0 %v1157
        %v2393 = vpop.f32.mrf.mxu0
        %v2394 = vadd.f32 %v2365, %v2393
        %v2395 = vpop.f32.mrf.mxu0
        %v2396 = vadd.f32 %v2367, %v2395
        %2397 = vmatmul.bf16.gmra.mxu0 %v1161
        %v2398 = vpop.f32.mrf.mxu0
        %v2399 = vadd.f32 %v2370, %v2398
        %v2400 = vpop.f32.mrf.mxu0
        %v2401 = vadd.f32 %v2372, %v2400
        %2402 = vmatmul.bf16.gmra.mxu0 %v1165
        %v2403 = vpop.f32.mrf.mxu0
        %v2404 = vadd.f32 %v2375, %v2403
        %v2405 = vpop.f32.mrf.mxu0
        %v2406 = vadd.f32 %v2377, %v2405
        %2407 = vdwg.mxu0
        %v2408 = vsub.f32 0.0, %v2041
        %v2409 = vsub.f32 0.0, %v2157
        %v2410 = vsub.f32 0.0, %v2273
        %v2411 = vsub.f32 0.0, %v2389
        %v2412 = vsub.f32 0.0, %v2043
        %v2413 = vsub.f32 0.0, %v2159
        %v2414 = vsub.f32 0.0, %v2275
        %v2415 = vsub.f32 0.0, %v2391
        %v2416 = vsub.f32 0.0, %v2046
        %v2417 = vsub.f32 0.0, %v2162
        %v2418 = vsub.f32 0.0, %v2278
        %v2419 = vsub.f32 0.0, %v2394
        %v2420 = vsub.f32 0.0, %v2048
        %v2421 = vsub.f32 0.0, %v2164
        %v2422 = vsub.f32 0.0, %v2280
        %v2423 = vsub.f32 0.0, %v2396
        %v2424 = vsub.f32 0.0, %v2051
        %v2425 = vsub.f32 0.0, %v2167
        %v2426 = vsub.f32 0.0, %v2283
        %v2427 = vsub.f32 0.0, %v2399
        %v2428 = vsub.f32 0.0, %v2053
        %v2429 = vsub.f32 0.0, %v2169
        %v2430 = vsub.f32 0.0, %v2285
        %v2431 = vsub.f32 0.0, %v2401
        %v2432 = vsub.f32 0.0, %v2056
        %v2433 = vsub.f32 0.0, %v2172
        %v2434 = vsub.f32 0.0, %v2288
        %v2435 = vsub.f32 0.0, %v2404
        %v2436 = vsub.f32 0.0, %v2058
        %v2437 = vsub.f32 0.0, %v2174
        %v2438 = vsub.f32 0.0, %v2290
        %v2439 = vsub.f32 0.0, %v2406
        %v2440 = vmul.f32 %v2408, 1.442695
        %v2441 = vpow.pop %v2440
        %v2442 = vmul.f32 %v2409, 1.442695
        %v2443 = vpow.pop %v2442
        %v2444 = vmul.f32 %v2410, 1.442695
        %v2445 = vpow.pop %v2444
        %v2446 = vmul.f32 %v2411, 1.442695
        %v2447 = vpow.pop %v2446
        %v2448 = vmul.f32 %v2412, 1.442695
        %v2449 = vpow.pop %v2448
        %v2450 = vmul.f32 %v2413, 1.442695
        %v2451 = vpow.pop %v2450
        %v2452 = vmul.f32 %v2414, 1.442695
        %v2453 = vpow.pop %v2452
        %v2454 = vmul.f32 %v2415, 1.442695
        %v2455 = vpow.pop %v2454
        %v2456 = vmul.f32 %v2416, 1.442695
        %v2457 = vpow.pop %v2456
        %v2458 = vmul.f32 %v2417, 1.442695
        %v2459 = vpow.pop %v2458
        %v2460 = vmul.f32 %v2418, 1.442695
        %v2461 = vpow.pop %v2460
        %v2462 = vmul.f32 %v2419, 1.442695
        %v2463 = vpow.pop %v2462
        %v2464 = vmul.f32 %v2420, 1.442695
        %v2465 = vpow.pop %v2464
        %v2466 = vmul.f32 %v2421, 1.442695
        %v2467 = vpow.pop %v2466
        %v2468 = vmul.f32 %v2422, 1.442695
        %v2469 = vpow.pop %v2468
        %v2470 = vmul.f32 %v2423, 1.442695
        %v2471 = vpow.pop %v2470
        %v2472 = vmul.f32 %v2424, 1.442695
        %v2473 = vpow.pop %v2472
        %v2474 = vmul.f32 %v2425, 1.442695
        %v2475 = vpow.pop %v2474
        %v2476 = vmul.f32 %v2426, 1.442695
        %v2477 = vpow.pop %v2476
        %v2478 = vmul.f32 %v2427, 1.442695
        %v2479 = vpow.pop %v2478
        %v2480 = vmul.f32 %v2428, 1.442695
        %v2481 = vpow.pop %v2480
        %v2482 = vmul.f32 %v2429, 1.442695
        %v2483 = vpow.pop %v2482
        %v2484 = vmul.f32 %v2430, 1.442695
        %v2485 = vpow.pop %v2484
        %v2486 = vmul.f32 %v2431, 1.442695
        %v2487 = vpow.pop %v2486
        %v2488 = vmul.f32 %v2432, 1.442695
        %v2489 = vpow.pop %v2488
        %v2490 = vmul.f32 %v2433, 1.442695
        %v2491 = vpow.pop %v2490
        %v2492 = vmul.f32 %v2434, 1.442695
        %v2493 = vpow.pop %v2492
        %v2494 = vmul.f32 %v2435, 1.442695
        %v2495 = vpow.pop %v2494
        %v2496 = vmul.f32 %v2436, 1.442695
        %v2497 = vpow.pop %v2496
        %v2498 = vmul.f32 %v2437, 1.442695
        %v2499 = vpow.pop %v2498
        %v2500 = vmul.f32 %v2438, 1.442695
        %v2501 = vpow.pop %v2500
        %v2502 = vmul.f32 %v2439, 1.442695
        %v2503 = vpow.pop %v2502
        %v2504 = vadd.f32 %v2441, 1.0
        %v2505 = vadd.f32 %v2443, 1.0
        %v2506 = vadd.f32 %v2445, 1.0
        %v2507 = vadd.f32 %v2447, 1.0
        %v2508 = vadd.f32 %v2449, 1.0
        %v2509 = vadd.f32 %v2451, 1.0
        %v2510 = vadd.f32 %v2453, 1.0
        %v2511 = vadd.f32 %v2455, 1.0
        %v2512 = vadd.f32 %v2457, 1.0
        %v2513 = vadd.f32 %v2459, 1.0
        %v2514 = vadd.f32 %v2461, 1.0
        %v2515 = vadd.f32 %v2463, 1.0
        %v2516 = vadd.f32 %v2465, 1.0
        %v2517 = vadd.f32 %v2467, 1.0
        %v2518 = vadd.f32 %v2469, 1.0
        %v2519 = vadd.f32 %v2471, 1.0
        %v2520 = vadd.f32 %v2473, 1.0
        %v2521 = vadd.f32 %v2475, 1.0
        %v2522 = vadd.f32 %v2477, 1.0
        %v2523 = vadd.f32 %v2479, 1.0
        %v2524 = vadd.f32 %v2481, 1.0
        %v2525 = vadd.f32 %v2483, 1.0
        %v2526 = vadd.f32 %v2485, 1.0
        %v2527 = vadd.f32 %v2487, 1.0
        %v2528 = vadd.f32 %v2489, 1.0
        %v2529 = vadd.f32 %v2491, 1.0
        %v2530 = vadd.f32 %v2493, 1.0
        %v2531 = vadd.f32 %v2495, 1.0
        %v2532 = vadd.f32 %v2497, 1.0
        %v2533 = vadd.f32 %v2499, 1.0
        %v2534 = vadd.f32 %v2501, 1.0
        %v2535 = vadd.f32 %v2503, 1.0
        %v2536 = vrcp.pop %v2504
        %v2537 = vrcp.pop %v2505
        %v2538 = vrcp.pop %v2506
        %v2539 = vrcp.pop %v2507
        %v2540 = vrcp.pop %v2508
        %v2541 = vrcp.pop %v2509
        %v2542 = vrcp.pop %v2510
        %v2543 = vrcp.pop %v2511
        %v2544 = vrcp.pop %v2512
        %v2545 = vrcp.pop %v2513
        %v2546 = vrcp.pop %v2514
        %v2547 = vrcp.pop %v2515
        %v2548 = vrcp.pop %v2516
        %v2549 = vrcp.pop %v2517
        %v2550 = vrcp.pop %v2518
        %v2551 = vrcp.pop %v2519
        %v2552 = vrcp.pop %v2520
        %v2553 = vrcp.pop %v2521
        %v2554 = vrcp.pop %v2522
        %v2555 = vrcp.pop %v2523
        %v2556 = vrcp.pop %v2524
        %v2557 = vrcp.pop %v2525
        %v2558 = vrcp.pop %v2526
        %v2559 = vrcp.pop %v2527
        %v2560 = vrcp.pop %v2528
        %v2561 = vrcp.pop %v2529
        %v2562 = vrcp.pop %v2530
        %v2563 = vrcp.pop %v2531
        %v2564 = vrcp.pop %v2532
        %v2565 = vrcp.pop %v2533
        %v2566 = vrcp.pop %v2534
        %v2567 = vrcp.pop %v2535
        %v2568 = vmul.f32 %v2041, %v2536
        %v2569 = vmul.f32 %v2157, %v2537
        %v2570 = vmul.f32 %v2273, %v2538
        %v2571 = vmul.f32 %v2389, %v2539
        %v2572 = vmul.f32 %v2043, %v2540
        %v2573 = vmul.f32 %v2159, %v2541
        %v2574 = vmul.f32 %v2275, %v2542
        %v2575 = vmul.f32 %v2391, %v2543
        %v2576 = vmul.f32 %v2046, %v2544
        %v2577 = vmul.f32 %v2162, %v2545
        %v2578 = vmul.f32 %v2278, %v2546
        %v2579 = vmul.f32 %v2394, %v2547
        %v2580 = vmul.f32 %v2048, %v2548
        %v2581 = vmul.f32 %v2164, %v2549
        %v2582 = vmul.f32 %v2280, %v2550
        %v2583 = vmul.f32 %v2396, %v2551
        %v2584 = vmul.f32 %v2051, %v2552
        %v2585 = vmul.f32 %v2167, %v2553
        %v2586 = vmul.f32 %v2283, %v2554
        %v2587 = vmul.f32 %v2399, %v2555
        %v2588 = vmul.f32 %v2053, %v2556
        %v2589 = vmul.f32 %v2169, %v2557
        %v2590 = vmul.f32 %v2285, %v2558
        %v2591 = vmul.f32 %v2401, %v2559
        %v2592 = vmul.f32 %v2056, %v2560
        %v2593 = vmul.f32 %v2172, %v2561
        %v2594 = vmul.f32 %v2288, %v2562
        %v2595 = vmul.f32 %v2404, %v2563
        %v2596 = vmul.f32 %v2058, %v2564
        %v2597 = vmul.f32 %v2174, %v2565
        %v2598 = vmul.f32 %v2290, %v2566
        %v2599 = vmul.f32 %v2406, %v2567
        %v2600 = vadd.f32 %v1118, %v2568
        %v2601 = vadd.f32 %v1119, %v2569
        %v2602 = vadd.f32 %v1120, %v2570
        %v2603 = vadd.f32 %v1121, %v2571
        %v2604 = vadd.f32 %v1122, %v2572
        %v2605 = vadd.f32 %v1123, %v2573
        %v2606 = vadd.f32 %v1124, %v2574
        %v2607 = vadd.f32 %v1125, %v2575
        %v2608 = vadd.f32 %v1126, %v2576
        %v2609 = vadd.f32 %v1127, %v2577
        %v2610 = vadd.f32 %v1128, %v2578
        %v2611 = vadd.f32 %v1129, %v2579
        %v2612 = vadd.f32 %v1130, %v2580
        %v2613 = vadd.f32 %v1131, %v2581
        %v2614 = vadd.f32 %v1132, %v2582
        %v2615 = vadd.f32 %v1133, %v2583
        %v2616 = vadd.f32 %v1134, %v2584
        %v2617 = vadd.f32 %v1135, %v2585
        %v2618 = vadd.f32 %v1136, %v2586
        %v2619 = vadd.f32 %v1137, %v2587
        %v2620 = vadd.f32 %v1138, %v2588
        %v2621 = vadd.f32 %v1139, %v2589
        %v2622 = vadd.f32 %v1140, %v2590
        %v2623 = vadd.f32 %v1141, %v2591
        %v2624 = vadd.f32 %v1142, %v2592
        %v2625 = vadd.f32 %v1143, %v2593
        %v2626 = vadd.f32 %v1144, %v2594
        %v2627 = vadd.f32 %v1145, %v2595
        %v2628 = vadd.f32 %v1146, %v2596
        %v2629 = vadd.f32 %v1147, %v2597
        %v2630 = vadd.f32 %v1148, %v2598
        %v2631 = vadd.f32 %v1149, %v2599
        %v2632 = vpack.c.bf16 %v2604, %v2600
        %v2633 = vpack.c.bf16 %v2605, %v2601
        %v2634 = vpack.c.bf16 %v2606, %v2602
        %v2635 = vpack.c.bf16 %v2607, %v2603
        %v2636 = vpack.c.bf16 %v2612, %v2608
        %v2637 = vpack.c.bf16 %v2613, %v2609
        %v2638 = vpack.c.bf16 %v2614, %v2610
        %v2639 = vpack.c.bf16 %v2615, %v2611
        %v2640 = vpack.c.bf16 %v2620, %v2616
        %v2641 = vpack.c.bf16 %v2621, %v2617
        %v2642 = vpack.c.bf16 %v2622, %v2618
        %v2643 = vpack.c.bf16 %v2623, %v2619
        %v2644 = vpack.c.bf16 %v2628, %v2624
        %v2645 = vpack.c.bf16 %v2629, %v2625
        %v2646 = vpack.c.bf16 %v2630, %v2626
        %v2647 = vpack.c.bf16 %v2631, %v2627
        %v2648 = vld [vmem:[%s5] sm:$0xf]
        %v2649 = vld [vmem:[%s5 + $0x4] sm:$0xf]
        %v2650 = vld [vmem:[%s5 + $0x8] sm:$0xf]
        %v2651 = vld [vmem:[%s5 + $0xc] sm:$0xf]
        %v2652 = vld [vmem:[%s5 + $0x10] sm:$0xf]
        %v2653 = vld [vmem:[%s5 + $0x14] sm:$0xf]
        %v2654 = vld [vmem:[%s5 + $0x18] sm:$0xf]
        %v2655 = vld [vmem:[%s5 + $0x1c] sm:$0xf]
        %v2656 = vld [vmem:[%s5 + $0x20] sm:$0xf]
        %v2657 = vld [vmem:[%s5 + $0x24] sm:$0xf]
        %v2658 = vld [vmem:[%s5 + $0x28] sm:$0xf]
        %v2659 = vld [vmem:[%s5 + $0x2c] sm:$0xf]
        %v2660 = vld [vmem:[%s5 + $0x30] sm:$0xf]
        %v2661 = vld [vmem:[%s5 + $0x34] sm:$0xf]
        %v2662 = vld [vmem:[%s5 + $0x38] sm:$0xf]
        %v2663 = vld [vmem:[%s5 + $0x3c] sm:$0xf]
        %v2664 = vld [vmem:[%s5 + $0x40] sm:$0xf]
        %v2665 = vld [vmem:[%s5 + $0x44] sm:$0xf]
        %v2666 = vld [vmem:[%s5 + $0x48] sm:$0xf]
        %v2667 = vld [vmem:[%s5 + $0x4c] sm:$0xf]
        %v2668 = vld [vmem:[%s5 + $0x50] sm:$0xf]
        %v2669 = vld [vmem:[%s5 + $0x54] sm:$0xf]
        %v2670 = vld [vmem:[%s5 + $0x58] sm:$0xf]
        %v2671 = vld [vmem:[%s5 + $0x5c] sm:$0xf]
        %v2672 = vld [vmem:[%s5 + $0x60] sm:$0xf]
        %v2673 = vld [vmem:[%s5 + $0x64] sm:$0xf]
        %v2674 = vld [vmem:[%s5 + $0x68] sm:$0xf]
        %v2675 = vld [vmem:[%s5 + $0x6c] sm:$0xf]
        %v2676 = vld [vmem:[%s5 + $0x70] sm:$0xf]
        %v2677 = vld [vmem:[%s5 + $0x74] sm:$0xf]
        %v2678 = vld [vmem:[%s5 + $0x78] sm:$0xf]
        %v2679 = vld [vmem:[%s5 + $0x7c] sm:$0xf]
        %v2680 = vld [vmem:[%s5 + $0x80] sm:$0xf]
        %v2681 = vld [vmem:[%s5 + $0x84] sm:$0xf]
        %v2682 = vld [vmem:[%s5 + $0x88] sm:$0xf]
        %v2683 = vld [vmem:[%s5 + $0x8c] sm:$0xf]
        %v2684 = vld [vmem:[%s5 + $0x90] sm:$0xf]
        %v2685 = vld [vmem:[%s5 + $0x94] sm:$0xf]
        %v2686 = vld [vmem:[%s5 + $0x98] sm:$0xf]
        %v2687 = vld [vmem:[%s5 + $0x9c] sm:$0xf]
        %v2688 = vld [vmem:[%s5 + $0xa0] sm:$0xf]
        %v2689 = vld [vmem:[%s5 + $0xa4] sm:$0xf]
        %v2690 = vld [vmem:[%s5 + $0xa8] sm:$0xf]
        %v2691 = vld [vmem:[%s5 + $0xac] sm:$0xf]
        %v2692 = vld [vmem:[%s5 + $0xb0] sm:$0xf]
        %v2693 = vld [vmem:[%s5 + $0xb4] sm:$0xf]
        %v2694 = vld [vmem:[%s5 + $0xb8] sm:$0xf]
        %v2695 = vld [vmem:[%s5 + $0xbc] sm:$0xf]
        %v2696 = vld [vmem:[%s5 + $0xc0] sm:$0xf]
        %v2697 = vld [vmem:[%s5 + $0xc4] sm:$0xf]
        %v2698 = vld [vmem:[%s5 + $0xc8] sm:$0xf]
        %v2699 = vld [vmem:[%s5 + $0xcc] sm:$0xf]
        %v2700 = vld [vmem:[%s5 + $0xd0] sm:$0xf]
        %v2701 = vld [vmem:[%s5 + $0xd4] sm:$0xf]
        %v2702 = vld [vmem:[%s5 + $0xd8] sm:$0xf]
        %v2703 = vld [vmem:[%s5 + $0xdc] sm:$0xf]
        %v2704 = vld [vmem:[%s5 + $0xe0] sm:$0xf]
        %v2705 = vld [vmem:[%s5 + $0xe4] sm:$0xf]
        %v2706 = vld [vmem:[%s5 + $0xe8] sm:$0xf]
        %v2707 = vld [vmem:[%s5 + $0xec] sm:$0xf]
        %v2708 = vld [vmem:[%s5 + $0xf0] sm:$0xf]
        %v2709 = vld [vmem:[%s5 + $0xf4] sm:$0xf]
        %v2710 = vld [vmem:[%s5 + $0xf8] sm:$0xf]
        %v2711 = vld [vmem:[%s5 + $0xfc] sm:$0xf]
        %v2712 = vld [vmem:[%s6] sm:$0x1]
        %v2714 = vperm.slane %v2712, 0
        %v2780 = vunpack.c.l.b16 %v2648
        %v2781 = vunpack.c.l.b16 %v2649
        %v2782 = vunpack.c.l.b16 %v2650
        %v2783 = vunpack.c.l.b16 %v2651
        %v2784 = vunpack.c.l.b16 %v2652
        %v2785 = vunpack.c.l.b16 %v2653
        %v2786 = vunpack.c.l.b16 %v2654
        %v2787 = vunpack.c.l.b16 %v2655
        %v2788 = vunpack.c.l.b16 %v2656
        %v2789 = vunpack.c.l.b16 %v2657
        %v2790 = vunpack.c.l.b16 %v2658
        %v2791 = vunpack.c.l.b16 %v2659
        %v2792 = vunpack.c.l.b16 %v2660
        %v2793 = vunpack.c.l.b16 %v2661
        %v2794 = vunpack.c.l.b16 %v2662
        %v2795 = vunpack.c.l.b16 %v2663
        %v2796 = vunpack.c.l.b16 %v2664
        %v2797 = vunpack.c.l.b16 %v2665
        %v2798 = vunpack.c.l.b16 %v2666
        %v2799 = vunpack.c.l.b16 %v2667
        %v2800 = vunpack.c.l.b16 %v2668
        %v2801 = vunpack.c.l.b16 %v2669
        %v2802 = vunpack.c.l.b16 %v2670
        %v2803 = vunpack.c.l.b16 %v2671
        %v2804 = vunpack.c.l.b16 %v2672
        %v2805 = vunpack.c.l.b16 %v2673
        %v2806 = vunpack.c.l.b16 %v2674
        %v2807 = vunpack.c.l.b16 %v2675
        %v2808 = vunpack.c.l.b16 %v2676
        %v2809 = vunpack.c.l.b16 %v2677
        %v2810 = vunpack.c.l.b16 %v2678
        %v2811 = vunpack.c.l.b16 %v2679
        %v2812 = vunpack.c.l.b16 %v2680
        %v2813 = vunpack.c.l.b16 %v2681
        %v2814 = vunpack.c.l.b16 %v2682
        %v2815 = vunpack.c.l.b16 %v2683
        %v2816 = vunpack.c.l.b16 %v2684
        %v2817 = vunpack.c.l.b16 %v2685
        %v2818 = vunpack.c.l.b16 %v2686
        %v2819 = vunpack.c.l.b16 %v2687
        %v2820 = vunpack.c.l.b16 %v2688
        %v2821 = vunpack.c.l.b16 %v2689
        %v2822 = vunpack.c.l.b16 %v2690
        %v2823 = vunpack.c.l.b16 %v2691
        %v2824 = vunpack.c.l.b16 %v2692
        %v2825 = vunpack.c.l.b16 %v2693
        %v2826 = vunpack.c.l.b16 %v2694
        %v2827 = vunpack.c.l.b16 %v2695
        %v2828 = vunpack.c.l.b16 %v2696
        %v2829 = vunpack.c.l.b16 %v2697
        %v2830 = vunpack.c.l.b16 %v2698
        %v2831 = vunpack.c.l.b16 %v2699
        %v2832 = vunpack.c.l.b16 %v2700
        %v2833 = vunpack.c.l.b16 %v2701
        %v2834 = vunpack.c.l.b16 %v2702
        %v2835 = vunpack.c.l.b16 %v2703
        %v2836 = vunpack.c.l.b16 %v2704
        %v2837 = vunpack.c.l.b16 %v2705
        %v2838 = vunpack.c.l.b16 %v2706
        %v2839 = vunpack.c.l.b16 %v2707
        %v2840 = vunpack.c.l.b16 %v2708
        %v2841 = vunpack.c.l.b16 %v2709
        %v2842 = vunpack.c.l.b16 %v2710
        %v2843 = vunpack.c.l.b16 %v2711
        %v2844 = vpack.c.b16 %v2781, %v2780
        %v2845 = vpack.c.b16 %v2783, %v2782
        %v2846 = vpack.c.b16 %v2785, %v2784
        %v2847 = vpack.c.b16 %v2787, %v2786
        %v2848 = vpack.c.b16 %v2789, %v2788
        %v2849 = vpack.c.b16 %v2791, %v2790
        %v2850 = vpack.c.b16 %v2793, %v2792
        %v2851 = vpack.c.b16 %v2795, %v2794
        %v2852 = vpack.c.b16 %v2797, %v2796
        %v2853 = vpack.c.b16 %v2799, %v2798
        %v2854 = vpack.c.b16 %v2801, %v2800
        %v2855 = vpack.c.b16 %v2803, %v2802
        %v2856 = vpack.c.b16 %v2805, %v2804
        %v2857 = vpack.c.b16 %v2807, %v2806
        %v2858 = vpack.c.b16 %v2809, %v2808
        %v2859 = vpack.c.b16 %v2811, %v2810
        %v2860 = vpack.c.b16 %v2813, %v2812
        %v2861 = vpack.c.b16 %v2815, %v2814
        %v2862 = vpack.c.b16 %v2817, %v2816
        %v2863 = vpack.c.b16 %v2819, %v2818
        %v2864 = vpack.c.b16 %v2821, %v2820
        %v2865 = vpack.c.b16 %v2823, %v2822
        %v2866 = vpack.c.b16 %v2825, %v2824
        %v2867 = vpack.c.b16 %v2827, %v2826
        %v2868 = vpack.c.b16 %v2829, %v2828
        %v2869 = vpack.c.b16 %v2831, %v2830
        %v2870 = vpack.c.b16 %v2833, %v2832
        %v2871 = vpack.c.b16 %v2835, %v2834
        %v2872 = vpack.c.b16 %v2837, %v2836
        %v2873 = vpack.c.b16 %v2839, %v2838
        %v2874 = vpack.c.b16 %v2841, %v2840
        %v2875 = vpack.c.b16 %v2843, %v2842
        %2908 = vmatpush.bf16.msra.mxu0 %v2851
        %2909 = vmatpush.bf16.msra.mxu0 %v2850
        %2910 = vmatpush.bf16.msra.mxu0 %v2849
        %2911 = vmatpush.bf16.msra.mxu0 %v2848
        %2912 = vmatpush.bf16.msra.mxu0 %v2847
        %2913 = vmatpush.bf16.msra.mxu0 %v2846
        %2914 = vmatpush.bf16.msra.mxu0 %v2845
        %2915 = vmatpush.bf16.msra.mxu0 %v2844
        %2916 = vmatmul.bf16.gmra.mxu0 %v2632
        %v2917 = vpop.f32.mrf.mxu0
        %v2918 = vadd.f32 %v2714, %v2917
        %v2919 = vpop.f32.mrf.mxu0
        %v2920 = vadd.f32 %v2714, %v2919
        %2921 = vmatmul.bf16.gmra.mxu0 %v2636
        %v2922 = vpop.f32.mrf.mxu0
        %v2923 = vadd.f32 %v2714, %v2922
        %v2924 = vpop.f32.mrf.mxu0
        %v2925 = vadd.f32 %v2714, %v2924
        %2926 = vmatmul.bf16.gmra.mxu0 %v2640
        %v2927 = vpop.f32.mrf.mxu0
        %v2928 = vadd.f32 %v2714, %v2927
        %v2929 = vpop.f32.mrf.mxu0
        %v2930 = vadd.f32 %v2714, %v2929
        %2931 = vmatmul.bf16.gmra.mxu0 %v2644
        %v2932 = vpop.f32.mrf.mxu0
        %v2933 = vadd.f32 %v2714, %v2932
        %v2934 = vpop.f32.mrf.mxu0
        %v2935 = vadd.f32 %v2714, %v2934
        %2936 = vdwg.mxu0
        %2937 = vmatpush.bf16.msra.mxu0 %v2859
        %2938 = vmatpush.bf16.msra.mxu0 %v2858
        %2939 = vmatpush.bf16.msra.mxu0 %v2857
        %2940 = vmatpush.bf16.msra.mxu0 %v2856
        %2941 = vmatpush.bf16.msra.mxu0 %v2855
        %2942 = vmatpush.bf16.msra.mxu0 %v2854
        %2943 = vmatpush.bf16.msra.mxu0 %v2853
        %2944 = vmatpush.bf16.msra.mxu0 %v2852
        %2945 = vmatmul.bf16.gmra.mxu0 %v2633
        %v2946 = vpop.f32.mrf.mxu0
        %v2947 = vadd.f32 %v2918, %v2946
        %v2948 = vpop.f32.mrf.mxu0
        %v2949 = vadd.f32 %v2920, %v2948
        %2950 = vmatmul.bf16.gmra.mxu0 %v2637
        %v2951 = vpop.f32.mrf.mxu0
        %v2952 = vadd.f32 %v2923, %v2951
        %v2953 = vpop.f32.mrf.mxu0
        %v2954 = vadd.f32 %v2925, %v2953
        %2955 = vmatmul.bf16.gmra.mxu0 %v2641
        %v2956 = vpop.f32.mrf.mxu0
        %v2957 = vadd.f32 %v2928, %v2956
        %v2958 = vpop.f32.mrf.mxu0
        %v2959 = vadd.f32 %v2930, %v2958
        %2960 = vmatmul.bf16.gmra.mxu0 %v2645
        %v2961 = vpop.f32.mrf.mxu0
        %v2962 = vadd.f32 %v2933, %v2961
        %v2963 = vpop.f32.mrf.mxu0
        %v2964 = vadd.f32 %v2935, %v2963
        %2965 = vdwg.mxu0
        %2966 = vmatpush.bf16.msra.mxu0 %v2867
        %2967 = vmatpush.bf16.msra.mxu0 %v2866
        %2968 = vmatpush.bf16.msra.mxu0 %v2865
        %2969 = vmatpush.bf16.msra.mxu0 %v2864
        %2970 = vmatpush.bf16.msra.mxu0 %v2863
        %2971 = vmatpush.bf16.msra.mxu0 %v2862
        %2972 = vmatpush.bf16.msra.mxu0 %v2861
        %2973 = vmatpush.bf16.msra.mxu0 %v2860
        %2974 = vmatmul.bf16.gmra.mxu0 %v2634
        %v2975 = vpop.f32.mrf.mxu0
        %v2976 = vadd.f32 %v2947, %v2975
        %v2977 = vpop.f32.mrf.mxu0
        %v2978 = vadd.f32 %v2949, %v2977
        %2979 = vmatmul.bf16.gmra.mxu0 %v2638
        %v2980 = vpop.f32.mrf.mxu0
        %v2981 = vadd.f32 %v2952, %v2980
        %v2982 = vpop.f32.mrf.mxu0
        %v2983 = vadd.f32 %v2954, %v2982
        %2984 = vmatmul.bf16.gmra.mxu0 %v2642
        %v2985 = vpop.f32.mrf.mxu0
        %v2986 = vadd.f32 %v2957, %v2985
        %v2987 = vpop.f32.mrf.mxu0
        %v2988 = vadd.f32 %v2959, %v2987
        %2989 = vmatmul.bf16.gmra.mxu0 %v2646
        %v2990 = vpop.f32.mrf.mxu0
        %v2991 = vadd.f32 %v2962, %v2990
        %v2992 = vpop.f32.mrf.mxu0
        %v2993 = vadd.f32 %v2964, %v2992
        %2994 = vdwg.mxu0
        %2995 = vmatpush.bf16.msra.mxu0 %v2875
        %2996 = vmatpush.bf16.msra.mxu0 %v2874
        %2997 = vmatpush.bf16.msra.mxu0 %v2873
        %2998 = vmatpush.bf16.msra.mxu0 %v2872
        %2999 = vmatpush.bf16.msra.mxu0 %v2871
        %3000 = vmatpush.bf16.msra.mxu0 %v2870
        %3001 = vmatpush.bf16.msra.mxu0 %v2869
        %3002 = vmatpush.bf16.msra.mxu0 %v2868
        %3003 = vmatmul.bf16.gmra.mxu0 %v2635
        %v3004 = vpop.f32.mrf.mxu0
        %v3005 = vadd.f32 %v2976, %v3004
        %v3006 = vpop.f32.mrf.mxu0
        %v3007 = vadd.f32 %v2978, %v3006
        %3008 = vmatmul.bf16.gmra.mxu0 %v2639
        %v3009 = vpop.f32.mrf.mxu0
        %v3010 = vadd.f32 %v2981, %v3009
        %v3011 = vpop.f32.mrf.mxu0
        %v3012 = vadd.f32 %v2983, %v3011
        %3013 = vmatmul.bf16.gmra.mxu0 %v2643
        %v3014 = vpop.f32.mrf.mxu0
        %v3015 = vadd.f32 %v2986, %v3014
        %v3016 = vpop.f32.mrf.mxu0
        %v3017 = vadd.f32 %v2988, %v3016
        %3018 = vmatmul.bf16.gmra.mxu0 %v2647
        %v3019 = vpop.f32.mrf.mxu0
        %v3020 = vadd.f32 %v2991, %v3019
        %v3021 = vpop.f32.mrf.mxu0
        %v3022 = vadd.f32 %v2993, %v3021
        %3023 = vdwg.mxu0
        %3024 = vst [vmem:[%s285] sm:$0xff] %v3005
        %3025 = vst [vmem:[%s285 + $0x8] sm:$0xff] %v3007
        %3026 = vst [vmem:[%s285 + $0x10] sm:$0xff] %v3010
        %3027 = vst [vmem:[%s285 + $0x18] sm:$0xff] %v3012
        %3028 = vst [vmem:[%s285 + $0x20] sm:$0xff] %v3015
        %3029 = vst [vmem:[%s285 + $0x28] sm:$0xff] %v3017
        %3030 = vst [vmem:[%s285 + $0x30] sm:$0xff] %v3020
        %3031 = vst [vmem:[%s285 + $0x38] sm:$0xff] %v3022
        %s3032 = sand.u32 %s178, 1
        %s3033 = sand.u32 %s178, 1
        %s3034 = smul.addr %s3033, 64
        %s3035 = scalar_lea.vmem [#allocation2], %s3034
        // Predicated region
        $region49: #{residual_mlp.1} parent=47 // pred_check
          %p3036 = pneg %p188
        $region50: #{residual_mlp.1} parent=47 // pred_check_branch
          %3038 = sbr.rel (%p3036) target = $region52
        $region51: #{residual_mlp.1} parent=47 // pred_region
          %s3039 = smul.u32 8, %s18
          %s3040 = ssub.s32 33, %s3039
          %p3041 = scmp.lt.s32.totalorder %s3040, 8
          %s3042 = scalar_select %p3041, %s3040, 8
          %s3043 = smul.u32 8, %s3042
          %p3044 = scmp.ne.s32.totalorder 0, %s3043
          %s3045 = smul.addr %s3039, 8
          %s3046 = scalar_lea.vmem %s7, %s3045
          // Predicated region
          $region53: #{residual_mlp.1} parent=51 // pred_check
            %p3047 = pneg %p3044
          $region54: #{residual_mlp.1} parent=51 // pred_check_branch
            %3049 = sbr.rel (%p3047) target = $region56
          $region55: #{residual_mlp.1} parent=51 // pred_region
            // Predicated region
            $region57: #{residual_mlp.1} parent=55 // pred_check
              _
            $region58: #{residual_mlp.1} parent=55 // pred_check_branch
              %3051 = sbr.rel (0) target = $region60
            $region59: #{residual_mlp.1} parent=55 // pred_region
              // Predicated region
              $region79: #{residual_mlp.1} parent=59 // pred_check
                _
              $region80: #{residual_mlp.1} parent=59 // pred_check_branch
                %3115 = sbr.rel (0) target = $region82
              $region81: #{residual_mlp.1} parent=59 // pred_region
                %s3116 = sshrl.u32 %s3042, 3
                // While loop
                $region83: #{residual_mlp.1} parent=81 // loop_pre_header
                  _
                $region84: #{residual_mlp.1} parent=81 // loop_header
                  %s3118 = sphi 0, %s3120
                  %p3119 = scmp.ge.s32.totalorder %s3118, %s3116
                  %s3123 = sphi 0, %s3144
                  %s3124 = sphi %s3035, %s3147
                  %s3125 = sphi %s3046, %s3148
                $region85: #{residual_mlp.1} parent=81 // loop_header_branch
                  %3122 = sbr.rel (%p3119) target = $region89
                $region86: #{residual_mlp.1} parent=81 // loop_body
                  %v3126 = vld [vmem:[%s3124] sm:$0xff]
                  %3127 = vst [vmem:[%s3125] sm:$0xff] %v3126
                  %v3128 = vld [vmem:[%s3124 + $0x8] sm:$0xff]
                  %3129 = vst [vmem:[%s3125 + $0x8] sm:$0xff] %v3128
                  %v3130 = vld [vmem:[%s3124 + $0x10] sm:$0xff]
                  %3131 = vst [vmem:[%s3125 + $0x10] sm:$0xff] %v3130
                  %v3132 = vld [vmem:[%s3124 + $0x18] sm:$0xff]
                  %3133 = vst [vmem:[%s3125 + $0x18] sm:$0xff] %v3132
                  %v3134 = vld [vmem:[%s3124 + $0x20] sm:$0xff]
                  %3135 = vst [vmem:[%s3125 + $0x20] sm:$0xff] %v3134
                  %v3136 = vld [vmem:[%s3124 + $0x28] sm:$0xff]
                  %3137 = vst [vmem:[%s3125 + $0x28] sm:$0xff] %v3136
                  %v3138 = vld [vmem:[%s3124 + $0x30] sm:$0xff]
                  %3139 = vst [vmem:[%s3125 + $0x30] sm:$0xff] %v3138
                  %v3140 = vld [vmem:[%s3124 + $0x38] sm:$0xff]
                  %3141 = vst [vmem:[%s3125 + $0x38] sm:$0xff] %v3140
                  %s3142 = sadd.s32 1, %s3123
                  %p3143 = scmp.ge.s32.totalorder %s3142, %s3116
                  %s3144 = scalar_select %p3143, 0, %s3142
                  %s3145 = smul.u32 %s3144, 64
                  %s3146 = smul.u32 %s3144, 64
                  %s3147 = scalar_lea.vmem %s3035, %s3145 [#allocation2]
                  %s3148 = scalar_lea.vmem %s3046, %s3146
                $region87: #{residual_mlp.1} parent=81 // loop_footer
                  %s3120 = sadd.s32 %s3118, 1
                $region88: #{residual_mlp.1} parent=81 // loop_footer_branch
                  %3117 = sbr.rel target = $region84
                $region89: #{residual_mlp.1} parent=81 // loop_exit
                  _
                %s3149 = sshrl.u32 %s3042, 3
                %s3150 = sand.u32 %s3042, 7
                %s3151 = smul.u32 %s3149, 8
                %s3152 = smul.u32 8, %s3151
                %s3153 = scalar_lea.vmem %s3035, %s3152 [#allocation2]
                %s3154 = smul.u32 8, %s3151
                %s3155 = scalar_lea.vmem %s3046, %s3154
                // While loop
                $region90: #{residual_mlp.1} parent=81 // loop_pre_header
                  _
                $region91: #{residual_mlp.1} parent=81 // loop_header
                  %s3157 = sphi 0, %s3159
                  %p3158 = scmp.ge.s32.totalorder %s3157, %s3150
                  %s3162 = sphi 0, %s3169
                  %s3163 = sphi %s3153, %s3172
                  %s3164 = sphi %s3155, %s3173
                $region92: #{residual_mlp.1} parent=81 // loop_header_branch
                  %3161 = sbr.rel (%p3158) target = $region96
                $region93: #{residual_mlp.1} parent=81 // loop_body
                  %v3165 = vld [vmem:[%s3163] sm:$0xff]
                  %3166 = vst [vmem:[%s3164] sm:$0xff] %v3165
                  %s3167 = sadd.s32 1, %s3162
                  %p3168 = scmp.ge.s32.totalorder %s3167, %s3150
                  %s3169 = scalar_select %p3168, 0, %s3167
                  %s3170 = smul.u32 %s3169, 8
                  %s3171 = smul.u32 %s3169, 8
                  %s3172 = scalar_lea.vmem %s3153, %s3170 [#allocation2]
                  %s3173 = scalar_lea.vmem %s3155, %s3171
                $region94: #{residual_mlp.1} parent=81 // loop_footer
                  %s3159 = sadd.s32 %s3157, 1
                $region95: #{residual_mlp.1} parent=81 // loop_footer_branch
                  %3156 = sbr.rel target = $region91
                $region96: #{residual_mlp.1} parent=81 // loop_exit
                  _
              $region82: #{residual_mlp.1} parent=59 // pred_fallthru
                _
              // Predicated region
              $region97: #{residual_mlp.1} parent=59 // pred_check
                _
              $region98: #{residual_mlp.1} parent=59 // pred_check_branch
                %3175 = sbr.rel target = $region100
              $region99: #{residual_mlp.1} parent=59 // pred_region
                _
              $region100: #{residual_mlp.1} parent=59 // pred_fallthru
                _
            $region60: #{residual_mlp.1} parent=55 // pred_fallthru
              _
            // Predicated region
            $region61: #{residual_mlp.1} parent=55 // pred_check
              _
            $region62: #{residual_mlp.1} parent=55 // pred_check_branch
              %3053 = sbr.rel target = $region64
            $region63: #{residual_mlp.1} parent=55 // pred_region
              %s3055 = ssub.s32 256, 1
              %s3056 = sshrl.u32 %s3042, 3
              // While loop
              $region65: #{residual_mlp.1} parent=63 // loop_pre_header
                _
              $region66: #{residual_mlp.1} parent=63 // loop_header
                %s3058 = sphi 0, %s3060
                %p3059 = scmp.ge.s32.totalorder %s3058, %s3056
                %s3063 = sphi 0, %s3084
                %s3064 = sphi %s3035, %s3087
                %s3065 = sphi %s3046, %s3088
              $region67: #{residual_mlp.1} parent=63 // loop_header_branch
                %3062 = sbr.rel (%p3059) target = $region71
              $region68: #{residual_mlp.1} parent=63 // loop_body
                %v3066 = vld [vmem:[%s3064] sm:%s3055]
                %3067 = vst [vmem:[%s3065] sm:%s3055] %v3066
                %v3068 = vld [vmem:[%s3064 + $0x8] sm:%s3055]
                %3069 = vst [vmem:[%s3065 + $0x8] sm:%s3055] %v3068
                %v3070 = vld [vmem:[%s3064 + $0x10] sm:%s3055]
                %3071 = vst [vmem:[%s3065 + $0x10] sm:%s3055] %v3070
                %v3072 = vld [vmem:[%s3064 + $0x18] sm:%s3055]
                %3073 = vst [vmem:[%s3065 + $0x18] sm:%s3055] %v3072
                %v3074 = vld [vmem:[%s3064 + $0x20] sm:%s3055]
                %3075 = vst [vmem:[%s3065 + $0x20] sm:%s3055] %v3074
                %v3076 = vld [vmem:[%s3064 + $0x28] sm:%s3055]
                %3077 = vst [vmem:[%s3065 + $0x28] sm:%s3055] %v3076
                %v3078 = vld [vmem:[%s3064 + $0x30] sm:%s3055]
                %3079 = vst [vmem:[%s3065 + $0x30] sm:%s3055] %v3078
                %v3080 = vld [vmem:[%s3064 + $0x38] sm:%s3055]
                %3081 = vst [vmem:[%s3065 + $0x38] sm:%s3055] %v3080
                %s3082 = sadd.s32 1, %s3063
                %p3083 = scmp.ge.s32.totalorder %s3082, %s3056
                %s3084 = scalar_select %p3083, 0, %s3082
                %s3085 = smul.u32 %s3084, 64
                %s3086 = smul.u32 %s3084, 64
                %s3087 = scalar_lea.vmem %s3035, %s3085 [#allocation2]
                %s3088 = scalar_lea.vmem %s3046, %s3086
              $region69: #{residual_mlp.1} parent=63 // loop_footer
                %s3060 = sadd.s32 %s3058, 1
              $region70: #{residual_mlp.1} parent=63 // loop_footer_branch
                %3057 = sbr.rel target = $region66
              $region71: #{residual_mlp.1} parent=63 // loop_exit
                _
              %s3089 = sshrl.u32 %s3042, 3
              %s3090 = sand.u32 %s3042, 7
              %s3091 = smul.u32 %s3089, 8
              %s3092 = smul.u32 8, %s3091
              %s3093 = scalar_lea.vmem %s3035, %s3092 [#allocation2]
              %s3094 = smul.u32 8, %s3091
              %s3095 = scalar_lea.vmem %s3046, %s3094
              // While loop
              $region72: #{residual_mlp.1} parent=63 // loop_pre_header
                _
              $region73: #{residual_mlp.1} parent=63 // loop_header
                %s3097 = sphi 0, %s3099
                %p3098 = scmp.ge.s32.totalorder %s3097, %s3090
                %s3102 = sphi 0, %s3109
                %s3103 = sphi %s3093, %s3112
                %s3104 = sphi %s3095, %s3113
              $region74: #{residual_mlp.1} parent=63 // loop_header_branch
                %3101 = sbr.rel (%p3098) target = $region78
              $region75: #{residual_mlp.1} parent=63 // loop_body
                %v3105 = vld [vmem:[%s3103] sm:%s3055]
                %3106 = vst [vmem:[%s3104] sm:%s3055] %v3105
                %s3107 = sadd.s32 1, %s3102
                %p3108 = scmp.ge.s32.totalorder %s3107, %s3090
                %s3109 = scalar_select %p3108, 0, %s3107
                %s3110 = smul.u32 %s3109, 8
                %s3111 = smul.u32 %s3109, 8
                %s3112 = scalar_lea.vmem %s3093, %s3110 [#allocation2]
                %s3113 = scalar_lea.vmem %s3095, %s3111
              $region76: #{residual_mlp.1} parent=63 // loop_footer
                %s3099 = sadd.s32 %s3097, 1
              $region77: #{residual_mlp.1} parent=63 // loop_footer_branch
                %3096 = sbr.rel target = $region73
              $region78: #{residual_mlp.1} parent=63 // loop_exit
                _
            $region64: #{residual_mlp.1} parent=55 // pred_fallthru
              _
          $region56: #{residual_mlp.1} parent=51 // pred_fallthru
            _
          %3176 = vnop
        $region52: #{residual_mlp.1} parent=47 // pred_fallthru
          _
      $region48: #{residual_mlp.1} parent=5 // pred_fallthru
        _
      %p3177 = scmp.le.s32.totalorder 2, %s13
      // Predicated region
      $region101: #{residual_mlp.1} parent=5 // pred_check
        %p3178 = pneg %p3177
      $region102: #{residual_mlp.1} parent=5 // pred_check_branch
        %3180 = sbr.rel (%p3178) target = $region104
      $region103: #{residual_mlp.1} parent=5 // pred_region
        %s3181 = ssub.s32 %s13, 2
        // Predicated region
        $region105: #{residual_mlp.1} parent=103 // pred_check
          %p3182 = pneg %p194
        $region106: #{residual_mlp.1} parent=103 // pred_check_branch
          %3184 = sbr.rel (%p3182) target = $region108
        $region107: #{residual_mlp.1} parent=103 // pred_region
          %s3185 = sand.u32 %s179, 1
          %s3186 = sand.u32 %s179, 1
          %s3187 = smul.addr %s3186, 64
          %s3188 = scalar_lea.vmem [#allocation2], %s3187
        $region108: #{residual_mlp.1} parent=103 // pred_fallthru
          _
      $region104: #{residual_mlp.1} parent=5 // pred_fallthru
        _
    $region6: #{residual_mlp.1} parent=1 // loop_footer
      %s17 = sadd.s32 1, %s13
    $region7: #{residual_mlp.1} parent=1 // loop_footer_branch
      %12 = sbr.rel target = $region3
    $region8: #{residual_mlp.1} parent=1 // loop_exit
      _

</llo_original>
